<compile_context>
chip_gen: v6e
topology: v6e:2x2x1
jax: 0.10.0
libtpu: 0.0.40
codegen_flags: <defaults>
</compile_context>

<pallas_src>
import math
import functools

import numpy as np
import jax
import jax.numpy as jnp
from jax.experimental import pallas as pl
from jax.experimental.pallas import tpu as pltpu


def conv_output_size(image_size, kernel_size, stride, padding):
    return int((image_size - kernel_size + 2 * padding) / stride + 1)


def _round_up(x, m):
    return ((x + m - 1) // m) * m


def _vmem_limit(block_bytes, margin=4 * 1024 * 1024):
    """Scoped-VMEM request derived from the actual block sizes (review item)."""
    return int(min(max(block_bytes + margin, 16 * 1024 * 1024), 64 * 1024 * 1024))


def _kj_runs(K, S):
    """Contiguous kj runs that share the same source column-group gj.
    Both the source lanes (sj*D ...) and destination lanes (idx*D ...) are
    contiguous across a run, so each run is ONE wide copy instead of `run`
    narrow ones.  Returns [(kj_start, gj, sj, run_len), ...]."""
    runs = []
    kj = 0
    while kj < K:
        gj, sj = divmod(kj, S)
        run = min(S - sj, K - kj)
        runs.append((kj, gj, sj, run))
        kj += run
    return runs


def _padded_geom(H_img, W_img, K, S):
    """Padded-image geometry for an Unfold(K, stride=S, padding=S//2) layer."""
    P = S // 2
    Ho = conv_output_size(H_img, K, S, P)
    Wo = conv_output_size(W_img, K, S, P)
    Hp = _round_up(max((Ho - 1) * S + K, H_img + P), S)
    Wp = _round_up(max((Wo - 1) * S + K, W_img + P), S)
    return P, Ho, Wo, Hp, Wp


# ---------------------------------------------------------------------------
# first-layer helper: zero-pad the RAW image (tiny) and reshape (free, no
# transpose) to the spatial-grouped layout (B, Hg, S, Wg, S*D) so the stride-S
# patch gather becomes unit-stride slicing inside the kernels.
# ---------------------------------------------------------------------------
def _pad_and_group(x_nhwc, K, S):
    P = S // 2
    B, H, W, D = x_nhwc.shape
    _, Ho, Wo, Hp, Wp = _padded_geom(H, W, K, S)
    xp = jnp.pad(x_nhwc, ((0, 0), (P, Hp - H - P), (P, Wp - W - P), (0, 0)))
    return xp.reshape(B, Hp // S, S, Wp // S, S * D), Ho, Wo


# ---------------------------------------------------------------------------
# Pallas kernel 1 (intermediate T2T layers):
#   Unfold(K,S,pad=S//2) + 'b c n -> b n c' + RearrangeImage
#   + zero-pad for the NEXT layer, all fused; whole image per grid step.
# Internal feature order: f = (ki*K + kj)*D + c  (input channel fastest).
# ---------------------------------------------------------------------------
def _unfold_to_padded_kernel(x_ref, o_ref, *, K, S, D, Ho, Wo, Pn):
    # x_ref : (Hg, S, Wg, S*D)     grouped padded input image (one batch elem)
    # o_ref : (Hp2, Wp2, K*K*D)    next layer's padded image (one batch elem)
    Hp2, Wp2, Dnew = o_ref.shape
    zeros = functools.partial(jnp.zeros, dtype=o_ref.dtype)

    # zero-fill the next layer's padding halo (static slices)
    if Pn > 0:
        o_ref[0:Pn, :, :] = zeros((Pn, Wp2, Dnew))
        o_ref[Pn:Pn + Ho, 0:Pn, :] = zeros((Ho, Pn, Dnew))
    bot = Hp2 - Pn - Ho
    if bot > 0:
        o_ref[Pn + Ho:Hp2, :, :] = zeros((bot, Wp2, Dnew))
    right = Wp2 - Pn - Wo
    if right > 0:
        o_ref[Pn:Pn + Ho, Pn + Wo:Wp2, :] = zeros((Ho, right, Dnew))

    # gather: K * ceil(K/S) big rectangular copies, merged over all Ho rows and
    # over kj values that share a column-group (review items 1 & 4).
    for ki in range(K):
        gi, si = divmod(ki, S)
        for kj0, gj, sj, run in _kj_runs(K, S):
            f0 = (ki * K + kj0) * D
            o_ref[Pn:Pn + Ho, Pn:Pn + Wo, f0:f0 + run * D] = (
                x_ref[gi:gi + Ho, si, gj:gj + Wo,
                      sj * D:(sj + run) * D].astype(o_ref.dtype))


def pallas_unfold_to_grouped(x_sg, *, K, S, D, Ho, Wo, K_next, S_next,
                             out_dtype=None):
    """Consumes this layer's grouped padded image (B, Hg, S, Wg, S*D) and
    returns the NEXT layer's grouped padded image
    (B, Hp2//S_next, S_next, Wp2//S_next, S_next*K*K*D) — no XLA pad/transpose
    of the K^2-expanded tensor ever happens."""
    B, Hg, S_, Wg, SD = x_sg.shape
    assert S_ == S and SD == S * D
    Dnew = K * K * D
    out_dtype = x_sg.dtype if out_dtype is None else out_dtype
    Pn, _, _, Hp2, Wp2 = _padded_geom(Ho, Wo, K_next, S_next)

    in_bytes = Hg * S * Wg * SD * x_sg.dtype.itemsize
    out_bytes = Hp2 * Wp2 * Dnew * jnp.dtype(out_dtype).itemsize

    out = pl.pallas_call(
        functools.partial(_unfold_to_padded_kernel, K=K, S=S, D=D,
                          Ho=Ho, Wo=Wo, Pn=Pn),
        grid=(B,),
        in_specs=[pl.BlockSpec((None, Hg, S, Wg, SD),
                               lambda b: (b, 0, 0, 0, 0))],
        out_specs=pl.BlockSpec((None, Hp2, Wp2, Dnew),
                               lambda b: (b, 0, 0, 0)),
        out_shape=jax.ShapeDtypeStruct((B, Hp2, Wp2, Dnew), out_dtype),
        compiler_params=pltpu.CompilerParams(
            dimension_semantics=("parallel",),          # B chunks -> both v7x TCs
            vmem_limit_bytes=_vmem_limit(2 * (in_bytes + out_bytes))),
    )(x_sg)
    # grouping for the next layer is a pure reshape of the padded image: free.
    return out.reshape(B, Hp2 // S_next, S_next, Wp2 // S_next, S_next * Dnew)


# ---------------------------------------------------------------------------
# Pallas kernel 2: fused (last unfold) + nn.Linear.
# All Ho*Wo token rows of a batch element are gathered into one (M, K*K*D)
# VMEM tile and matmul'd against the VMEM-resident weight (K*K*D, E_pad):
# the K^2-expanded tokens never touch HBM and the MXU sees the largest M
# the problem allows per batch element.
# ---------------------------------------------------------------------------
def _unfold_linear_kernel(x_ref, w_ref, b_ref, o_ref, g_ref, *, K, S, D, Ho, Wo):
    # x_ref : (Hg, S, Wg, S*D)   grouped padded image (one batch elem)
    # w_ref : (K*K*D, E_pad)     permuted + padded weight, VMEM-resident
    # b_ref : (1, E_pad)         padded bias (f32)
    # o_ref : (Ho*Wo, E_pad)     embedded tokens for this batch elem
    # g_ref : (Ho*Wo, K*K*D)     VMEM scratch: gathered patch tile
    for ki in range(K):
        gi, si = divmod(ki, S)
        for kj0, gj, sj, run in _kj_runs(K, S):
            f0 = (ki * K + kj0) * D
            for h in range(Ho):
                g_ref[h * Wo:(h + 1) * Wo, f0:f0 + run * D] = (
                    x_ref[gi + h, si, gj:gj + Wo,
                          sj * D:(sj + run) * D].astype(g_ref.dtype))
    acc = jnp.dot(g_ref[...], w_ref[...], preferred_element_type=jnp.float32)
    o_ref[...] = (acc + b_ref[...]).astype(o_ref.dtype)   # bias add in f32


def pallas_unfold_linear(x_sg, *, K, S, D, Ho, Wo, w_pad, b_pad, out_dtype):
    """Fused Unfold(K, S, pad=S//2) + Linear over the grouped padded image."""
    B, Hg, S_, Wg, SD = x_sg.shape
    D2, Ep = w_pad.shape
    assert D2 == K * K * D and S_ == S and SD == S * D
    M = Ho * Wo

    in_b = Hg * S * Wg * SD * x_sg.dtype.itemsize
    out_b = M * Ep * jnp.dtype(out_dtype).itemsize
    w_b = D2 * Ep * w_pad.dtype.itemsize
    g_b = M * D2 * w_pad.dtype.itemsize
    budget = 2 * (in_b + out_b) + w_b + Ep * 4 + g_b

    out = pl.pallas_call(
        functools.partial(_unfold_linear_kernel, K=K, S=S, D=D, Ho=Ho, Wo=Wo),
        grid=(B,),
        in_specs=[
            pl.BlockSpec((None, Hg, S, Wg, SD), lambda b: (b, 0, 0, 0, 0)),
            pl.BlockSpec((D2, Ep), lambda b: (0, 0)),   # weight resident in VMEM
            pl.BlockSpec((1, Ep), lambda b: (0, 0)),    # bias resident
        ],
        out_specs=pl.BlockSpec((None, M, Ep), lambda b: (b, 0, 0)),
        out_shape=jax.ShapeDtypeStruct((B, M, Ep), out_dtype),
        scratch_shapes=[pltpu.VMEM((M, D2), w_pad.dtype)],
        compiler_params=pltpu.CompilerParams(
            dimension_semantics=("parallel",),
            vmem_limit_bytes=_vmem_limit(budget)),
    )(x_sg, w_pad, b_pad)
    return out


# ---------------------------------------------------------------------------
# feature-order bookkeeping: internal (ki,kj)-major order -> torch Unfold order
# ---------------------------------------------------------------------------
def _torch_channel_labels(in_chans, t2t_layers):
    """label[f_internal] = f_torch for the composed unfold feature dimension."""
    label = np.arange(in_chans, dtype=np.int32)
    for K, _ in t2t_layers:
        label = (label[None, :] * (K * K)
                 + np.arange(K * K, dtype=np.int32)[:, None]).reshape(-1)
    return label


# ---------------------------------------------------------------------------
# T2T_module port
# ---------------------------------------------------------------------------
class T2TModulePallas:
    """Pallas/JAX port of T2T_module (forward pass)."""

    def __init__(self, key, image_size=16, in_chans=4, embed_dim=32,
                 t2t_layers=((3, 2), (3, 2)), matmul_dtype=jnp.bfloat16,
                 inter_dtype=None):
        # matmul_dtype=bf16: MXU-native on v5e/v6e/v7x, halves HBM/VMEM traffic;
        # accumulation stays f32.  Use jnp.float32 for bit-exact f32 numerics.
        self.t2t_layers = tuple(t2t_layers)
        self.embed_dim = int(embed_dim)
        self.matmul_dtype = matmul_dtype
        self.inter_dtype = matmul_dtype if inter_dtype is None else inter_dtype

        layer_dim = in_chans
        output_image_size = image_size
        for K, S in self.t2t_layers:
            layer_dim *= K * K
            output_image_size = conv_output_size(output_image_size, K, S, S // 2)
        self.layer_dim = layer_dim
        self.output_image_size = output_image_size

        kw, kb = jax.random.split(key)
        bound = 1.0 / math.sqrt(layer_dim)
        # torch-ordered nn.Linear parameters (same as the reference module)
        self.weight = jax.random.uniform(kw, (embed_dim, layer_dim),
                                         minval=-bound, maxval=bound,
                                         dtype=jnp.float32)
        self.bias = jax.random.uniform(kb, (embed_dim,),
                                       minval=-bound, maxval=bound,
                                       dtype=jnp.float32)

        # Permute weight columns into the kernels' internal feature order and
        # zero-pad E up to a 128 multiple (unmasked stores / full MXU columns).
        label = _torch_channel_labels(in_chans, self.t2t_layers)
        assert np.array_equal(np.sort(label), np.arange(layer_dim))
        Epad = _round_up(embed_dim, 128)
        w_int = jnp.transpose(self.weight[:, jnp.asarray(label)], (1, 0))
        self.w_pad = (jnp.zeros((layer_dim, Epad), matmul_dtype)
                      .at[:, :embed_dim].set(w_int.astype(matmul_dtype)))
        self.b_pad = (jnp.zeros((1, Epad), jnp.float32)
                      .at[0, :embed_dim].set(self.bias))

    def __call__(self, image, return_padded=False):
        # One raw-input-sized NCHW -> NHWC transpose; everything downstream is
        # channels-last and padded layouts are produced inside the kernels, so
        # no further XLA pad/transpose of any K^2-expanded tensor happens.
        x = jnp.transpose(image, (0, 2, 3, 1))
        B, H, W, D = x.shape
        layers = self.t2t_layers
        K0, S0 = layers[0]
        x_sg, Ho, Wo = _pad_and_group(x, K0, S0)   # raw-sized pad only

        out = None
        for i, (K, S) in enumerate(layers):
            if i < len(layers) - 1:
                Kn, Sn = layers[i + 1]
                x_sg = pallas_unfold_to_grouped(
                    x_sg, K=K, S=S, D=D, Ho=Ho, Wo=Wo,
                    K_next=Kn, S_next=Sn, out_dtype=self.inter_dtype)
                # TODO(synk): the Transformer/Performer token-mixer classes are
                # not defined in the provided source; treated as identity here.
                D = D * K * K
                Pn = Sn // 2
                Ho, Wo = (conv_output_size(Ho, Kn, Sn, Pn),
                          conv_output_size(Wo, Kn, Sn, Pn))
            else:
                out = pallas_unfold_linear(
                    x_sg, K=K, S=S, D=D, Ho=Ho, Wo=Wo,
                    w_pad=self.w_pad, b_pad=self.b_pad, out_dtype=image.dtype)
        if return_padded:           # skip the E-slice when the consumer takes E_pad
            return out
        return out[:, :, :self.embed_dim]


# ---------------------------------------------------------------------------
# pure numpy reference (torch ordering, for correctness checking)
# ---------------------------------------------------------------------------
def np_unfold(x, K, S):
    P = S // 2
    B, C, H, W = x.shape
    Ho = conv_output_size(H, K, S, P)
    Wo = conv_output_size(W, K, S, P)
    xp = np.pad(x, ((0, 0), (0, 0), (P, P), (P, P)))
    cols = np.zeros((B, C, K, K, Ho, Wo), x.dtype)
    for ki in range(K):
        for kj in range(K):
            cols[:, :, ki, kj] = xp[:, :, ki:ki + (Ho - 1) * S + 1:S,
                                          kj:kj + (Wo - 1) * S + 1:S]
    return cols.reshape(B, C * K * K, Ho * Wo).transpose(0, 2, 1)


def np_forward(image, t2t_layers, weight, bias):
    x = np.asarray(image)
    for i, (k, s) in enumerate(t2t_layers):
        if i != 0:
            b, n, c = x.shape
            h = int(math.sqrt(n))
            x = x.reshape(b, h, h, c).transpose(0, 3, 1, 2)
        x = np_unfold(x, k, s)
    return x @ np.asarray(weight).T + np.asarray(bias)


if __name__ == "__main__":
    B, C, H = 2, 4, 16
    embed_dim = 32
    t2t_layers = ((3, 2), (3, 2))

    key = jax.random.PRNGKey(0)
    k_img, k_par = jax.random.split(key)
    image = jax.random.normal(k_img, (B, C, H, H), dtype=jnp.float32)

    module = T2TModulePallas(k_par, image_size=H, in_chans=C,
                             embed_dim=embed_dim, t2t_layers=t2t_layers)
    out = jax.block_until_ready(module(image))

    # check 1: first unfold layer vs. torch-ordered numpy reference (exact, f32).
    K0, S0 = t2t_layers[0]
    K1, S1 = t2t_layers[1]
    x_nhwc = jnp.transpose(image, (0, 2, 3, 1))
    x_sg0, Ho0, Wo0 = _pad_and_group(x_nhwc, K0, S0)
    g1 = jax.block_until_ready(pallas_unfold_to_grouped(
        x_sg0, K=K0, S=S0, D=C, Ho=Ho0, Wo=Wo0,
        K_next=K1, S_next=S1, out_dtype=jnp.float32))
    D1 = C * K0 * K0
    Bq, Hg2, S1_, Wg2, SD2 = g1.shape
    Hp2, Wp2 = Hg2 * S1_, Wg2 * (SD2 // D1)
    P1 = S1 // 2
    img1 = np.asarray(g1).reshape(Bq, Hp2, Wp2, D1)       # ungroup (free reshape)
    halo = img1.copy()
    halo[:, P1:P1 + Ho0, P1:P1 + Wo0, :] = 0.0
    assert np.all(halo == 0.0), "next-layer padding halo must be zero"
    tok_int = img1[:, P1:P1 + Ho0, P1:P1 + Wo0, :].reshape(Bq, Ho0 * Wo0, D1)
    tok_torch = np_unfold(np.asarray(image), K0, S0)
    label1 = _torch_channel_labels(C, t2t_layers[:1])
    np.testing.assert_allclose(tok_int, tok_torch[..., label1], rtol=0, atol=0)

    # check 2: end-to-end vs numpy reference of the original module
    # (bf16 matmul path with f32 accumulation -> loose tolerance).
    ref = np_forward(image, t2t_layers, module.weight, module.bias)
    assert out.shape == (B, module.output_image_size ** 2, embed_dim), out.shape
    np.testing.assert_allclose(np.asarray(out), ref, rtol=5e-2, atol=5e-2)

    print("KERNEL_OK")
</pallas_src>

<mosaic_0001>
module attributes {stable_mosaic.version = 11 : i64} {
  func.func @_unfold_to_padded_kernel(%arg0: i32, %arg1: memref<1x9x2x9x8xf32, #tpu.memory_space<vmem>>, %arg2: memref<1x10x10x36xbf16, #tpu.memory_space<vmem>>) attributes {dimension_semantics = [#tpu.dimension_semantics<parallel>], iteration_bounds = array<i64: 2>, scalar_prefetch = 0 : i64, scratch_operands = 0 : i64, tpu.core_type = #tpu.core_type<tc>, window_params = [{transform_indices = @transform_0, window_bounds = array<i64: 1, 9, 2, 9, 8>}, {transform_indices = @transform_1, window_bounds = array<i64: 1, 10, 10, 36>}]} {
    %cst = arith.constant 0.000000e+00 : bf16
    %0 = vector.broadcast %cst : bf16 to vector<1x10x36xbf16>
    %c0 = arith.constant 0 : index
    %c0_0 = arith.constant 0 : index
    %c0_1 = arith.constant 0 : index
    %c0_2 = arith.constant 0 : index
    %1 = vector.load %arg2[%c0, %c0_0, %c0_1, %c0_2] : memref<1x10x10x36xbf16, #tpu.memory_space<vmem>>, vector<1x1x10x36xbf16>
    %2 = vector.shape_cast %1 : vector<1x1x10x36xbf16> to vector<1x10x36xbf16>
    %3 = vector.shape_cast %0 : vector<1x10x36xbf16> to vector<1x1x10x36xbf16>
    tpu.vector_store %arg2[%c0, %c0_0, %c0_1, %c0_2], %3 {strides = array<i32>} : memref<1x10x10x36xbf16, #tpu.memory_space<vmem>>, vector<1x1x10x36xbf16>,
    %cst_3 = arith.constant 0.000000e+00 : bf16
    %4 = vector.broadcast %cst_3 : bf16 to vector<8x1x36xbf16>
    %c0_4 = arith.constant 0 : index
    %c1 = arith.constant 1 : index
    %c0_5 = arith.constant 0 : index
    %c0_6 = arith.constant 0 : index
    %5 = vector.load %arg2[%c0_4, %c1, %c0_5, %c0_6] : memref<1x10x10x36xbf16, #tpu.memory_space<vmem>>, vector<1x8x1x36xbf16>
    %6 = vector.shape_cast %5 : vector<1x8x1x36xbf16> to vector<8x1x36xbf16>
    %7 = vector.shape_cast %4 : vector<8x1x36xbf16> to vector<1x8x1x36xbf16>
    tpu.vector_store %arg2[%c0_4, %c1, %c0_5, %c0_6], %7 {strides = array<i32>} : memref<1x10x10x36xbf16, #tpu.memory_space<vmem>>, vector<1x8x1x36xbf16>,
    %cst_7 = arith.constant 0.000000e+00 : bf16
    %8 = vector.broadcast %cst_7 : bf16 to vector<1x10x36xbf16>
    %c0_8 = arith.constant 0 : index
    %c9 = arith.constant 9 : index
    %c0_9 = arith.constant 0 : index
    %c0_10 = arith.constant 0 : index
    %9 = vector.load %arg2[%c0_8, %c9, %c0_9, %c0_10] : memref<1x10x10x36xbf16, #tpu.memory_space<vmem>>, vector<1x1x10x36xbf16>
    %10 = vector.shape_cast %9 : vector<1x1x10x36xbf16> to vector<1x10x36xbf16>
    %11 = vector.shape_cast %8 : vector<1x10x36xbf16> to vector<1x1x10x36xbf16>
    tpu.vector_store %arg2[%c0_8, %c9, %c0_9, %c0_10], %11 {strides = array<i32>} : memref<1x10x10x36xbf16, #tpu.memory_space<vmem>>, vector<1x1x10x36xbf16>,
    %cst_11 = arith.constant 0.000000e+00 : bf16
    %12 = vector.broadcast %cst_11 : bf16 to vector<8x1x36xbf16>
    %c0_12 = arith.constant 0 : index
    %c1_13 = arith.constant 1 : index
    %c9_14 = arith.constant 9 : index
    %c0_15 = arith.constant 0 : index
    %13 = vector.load %arg2[%c0_12, %c1_13, %c9_14, %c0_15] : memref<1x10x10x36xbf16, #tpu.memory_space<vmem>>, vector<1x8x1x36xbf16>
    %14 = vector.shape_cast %13 : vector<1x8x1x36xbf16> to vector<8x1x36xbf16>
    %15 = vector.shape_cast %12 : vector<8x1x36xbf16> to vector<1x8x1x36xbf16>
    tpu.vector_store %arg2[%c0_12, %c1_13, %c9_14, %c0_15], %15 {strides = array<i32>} : memref<1x10x10x36xbf16, #tpu.memory_space<vmem>>, vector<1x8x1x36xbf16>,
    %c0_16 = arith.constant 0 : index
    %c0_17 = arith.constant 0 : index
    %c0_18 = arith.constant 0 : index
    %c0_19 = arith.constant 0 : index
    %c0_20 = arith.constant 0 : index
    %16 = vector.load %arg1[%c0_16, %c0_17, %c0_18, %c0_19, %c0_20] : memref<1x9x2x9x8xf32, #tpu.memory_space<vmem>>, vector<1x8x1x8x8xf32>
    %17 = vector.shape_cast %16 : vector<1x8x1x8x8xf32> to vector<8x8x8xf32>
    %18 = arith.truncf %17 : vector<8x8x8xf32> to vector<8x8x8xbf16>
    %c0_21 = arith.constant 0 : index
    %c1_22 = arith.constant 1 : index
    %c1_23 = arith.constant 1 : index
    %c0_24 = arith.constant 0 : index
    %19 = vector.load %arg2[%c0_21, %c1_22, %c1_23, %c0_24] : memref<1x10x10x36xbf16, #tpu.memory_space<vmem>>, vector<1x8x8x8xbf16>
    %20 = vector.shape_cast %19 : vector<1x8x8x8xbf16> to vector<8x8x8xbf16>
    %21 = vector.shape_cast %18 : vector<8x8x8xbf16> to vector<1x8x8x8xbf16>
    tpu.vector_store %arg2[%c0_21, %c1_22, %c1_23, %c0_24], %21 {strides = array<i32>} : memref<1x10x10x36xbf16, #tpu.memory_space<vmem>>, vector<1x8x8x8xbf16>,
    %c0_25 = arith.constant 0 : index
    %c0_26 = arith.constant 0 : index
    %c0_27 = arith.constant 0 : index
    %c1_28 = arith.constant 1 : index
    %c0_29 = arith.constant 0 : index
    %22 = vector.load %arg1[%c0_25, %c0_26, %c0_27, %c1_28, %c0_29] : memref<1x9x2x9x8xf32, #tpu.memory_space<vmem>>, vector<1x8x1x8x4xf32>
    %23 = vector.shape_cast %22 : vector<1x8x1x8x4xf32> to vector<8x8x4xf32>
    %24 = arith.truncf %23 : vector<8x8x4xf32> to vector<8x8x4xbf16>
    %c0_30 = arith.constant 0 : index
    %c1_31 = arith.constant 1 : index
    %c1_32 = arith.constant 1 : index
    %c8 = arith.constant 8 : index
    %25 = vector.load %arg2[%c0_30, %c1_31, %c1_32, %c8] : memref<1x10x10x36xbf16, #tpu.memory_space<vmem>>, vector<1x8x8x4xbf16>
    %26 = vector.shape_cast %25 : vector<1x8x8x4xbf16> to vector<8x8x4xbf16>
    %27 = vector.shape_cast %24 : vector<8x8x4xbf16> to vector<1x8x8x4xbf16>
    tpu.vector_store %arg2[%c0_30, %c1_31, %c1_32, %c8], %27 {strides = array<i32>} : memref<1x10x10x36xbf16, #tpu.memory_space<vmem>>, vector<1x8x8x4xbf16>,
    %c0_33 = arith.constant 0 : index
    %c0_34 = arith.constant 0 : index
    %c1_35 = arith.constant 1 : index
    %c0_36 = arith.constant 0 : index
    %c0_37 = arith.constant 0 : index
    %28 = vector.load %arg1[%c0_33, %c0_34, %c1_35, %c0_36, %c0_37] : memref<1x9x2x9x8xf32, #tpu.memory_space<vmem>>, vector<1x8x1x8x8xf32>
    %29 = vector.shape_cast %28 : vector<1x8x1x8x8xf32> to vector<8x8x8xf32>
    %30 = arith.truncf %29 : vector<8x8x8xf32> to vector<8x8x8xbf16>
    %c0_38 = arith.constant 0 : index
    %c1_39 = arith.constant 1 : index
    %c1_40 = arith.constant 1 : index
    %c12 = arith.constant 12 : index
    %31 = vector.load %arg2[%c0_38, %c1_39, %c1_40, %c12] : memref<1x10x10x36xbf16, #tpu.memory_space<vmem>>, vector<1x8x8x8xbf16>
    %32 = vector.shape_cast %31 : vector<1x8x8x8xbf16> to vector<8x8x8xbf16>
    %33 = vector.shape_cast %30 : vector<8x8x8xbf16> to vector<1x8x8x8xbf16>
    tpu.vector_store %arg2[%c0_38, %c1_39, %c1_40, %c12], %33 {strides = array<i32>} : memref<1x10x10x36xbf16, #tpu.memory_space<vmem>>, vector<1x8x8x8xbf16>,
    %c0_41 = arith.constant 0 : index
    %c0_42 = arith.constant 0 : index
    %c1_43 = arith.constant 1 : index
    %c1_44 = arith.constant 1 : index
    %c0_45 = arith.constant 0 : index
    %34 = vector.load %arg1[%c0_41, %c0_42, %c1_43, %c1_44, %c0_45] : memref<1x9x2x9x8xf32, #tpu.memory_space<vmem>>, vector<1x8x1x8x4xf32>
    %35 = vector.shape_cast %34 : vector<1x8x1x8x4xf32> to vector<8x8x4xf32>
    %36 = arith.truncf %35 : vector<8x8x4xf32> to vector<8x8x4xbf16>
    %c0_46 = arith.constant 0 : index
    %c1_47 = arith.constant 1 : index
    %c1_48 = arith.constant 1 : index
    %c20 = arith.constant 20 : index
    %37 = vector.load %arg2[%c0_46, %c1_47, %c1_48, %c20] : memref<1x10x10x36xbf16, #tpu.memory_space<vmem>>, vector<1x8x8x4xbf16>
    %38 = vector.shape_cast %37 : vector<1x8x8x4xbf16> to vector<8x8x4xbf16>
    %39 = vector.shape_cast %36 : vector<8x8x4xbf16> to vector<1x8x8x4xbf16>
    tpu.vector_store %arg2[%c0_46, %c1_47, %c1_48, %c20], %39 {strides = array<i32>} : memref<1x10x10x36xbf16, #tpu.memory_space<vmem>>, vector<1x8x8x4xbf16>,
    %c0_49 = arith.constant 0 : index
    %c1_50 = arith.constant 1 : index
    %c0_51 = arith.constant 0 : index
    %c0_52 = arith.constant 0 : index
    %c0_53 = arith.constant 0 : index
    %40 = vector.load %arg1[%c0_49, %c1_50, %c0_51, %c0_52, %c0_53] : memref<1x9x2x9x8xf32, #tpu.memory_space<vmem>>, vector<1x8x1x8x8xf32>
    %41 = vector.shape_cast %40 : vector<1x8x1x8x8xf32> to vector<8x8x8xf32>
    %42 = arith.truncf %41 : vector<8x8x8xf32> to vector<8x8x8xbf16>
    %c0_54 = arith.constant 0 : index
    %c1_55 = arith.constant 1 : index
    %c1_56 = arith.constant 1 : index
    %c24 = arith.constant 24 : index
    %43 = vector.load %arg2[%c0_54, %c1_55, %c1_56, %c24] : memref<1x10x10x36xbf16, #tpu.memory_space<vmem>>, vector<1x8x8x8xbf16>
    %44 = vector.shape_cast %43 : vector<1x8x8x8xbf16> to vector<8x8x8xbf16>
    %45 = vector.shape_cast %42 : vector<8x8x8xbf16> to vector<1x8x8x8xbf16>
    tpu.vector_store %arg2[%c0_54, %c1_55, %c1_56, %c24], %45 {strides = array<i32>} : memref<1x10x10x36xbf16, #tpu.memory_space<vmem>>, vector<1x8x8x8xbf16>,
    %c0_57 = arith.constant 0 : index
    %c1_58 = arith.constant 1 : index
    %c0_59 = arith.constant 0 : index
    %c1_60 = arith.constant 1 : index
    %c0_61 = arith.constant 0 : index
    %46 = vector.load %arg1[%c0_57, %c1_58, %c0_59, %c1_60, %c0_61] : memref<1x9x2x9x8xf32, #tpu.memory_space<vmem>>, vector<1x8x1x8x4xf32>
    %47 = vector.shape_cast %46 : vector<1x8x1x8x4xf32> to vector<8x8x4xf32>
    %48 = arith.truncf %47 : vector<8x8x4xf32> to vector<8x8x4xbf16>
    %c0_62 = arith.constant 0 : index
    %c1_63 = arith.constant 1 : index
    %c1_64 = arith.constant 1 : index
    %c32 = arith.constant 32 : index
    %49 = vector.load %arg2[%c0_62, %c1_63, %c1_64, %c32] : memref<1x10x10x36xbf16, #tpu.memory_space<vmem>>, vector<1x8x8x4xbf16>
    %50 = vector.shape_cast %49 : vector<1x8x8x4xbf16> to vector<8x8x4xbf16>
    %51 = vector.shape_cast %48 : vector<8x8x4xbf16> to vector<1x8x8x4xbf16>
    tpu.vector_store %arg2[%c0_62, %c1_63, %c1_64, %c32], %51 {strides = array<i32>} : memref<1x10x10x36xbf16, #tpu.memory_space<vmem>>, vector<1x8x8x4xbf16>,
    return
  }
  func.func @transform_0(%arg0: i32) -> (i32, i32, i32, i32, i32) {
    %c0_i32 = arith.constant 0 : i32
    %c0_i32_0 = arith.constant 0 : i32
    %c0_i32_1 = arith.constant 0 : i32
    %c0_i32_2 = arith.constant 0 : i32
    %c0_i32_3 = arith.constant 0 : i32
    return %arg0, %c0_i32, %c0_i32_0, %c0_i32_1, %c0_i32_2 : i32, i32, i32, i32, i32
  }
  func.func @transform_1(%arg0: i32) -> (i32, i32, i32, i32) {
    %c0_i32 = arith.constant 0 : i32
    %c0_i32_0 = arith.constant 0 : i32
    %c0_i32_1 = arith.constant 0 : i32
    %c0_i32_2 = arith.constant 0 : i32
    return %arg0, %c0_i32, %c0_i32_0, %c0_i32_1 : i32, i32, i32, i32
  }
}

</mosaic_0001>

<llo_original>
// kernel: tpu_custom_call.1
$region0: #{tpu_custom_call.1}
  #allocation0 [shape = 'u32[]', space=smem, size = 0x4, offset = 0x4, fixed_abs, tag = 'smem constant byte address 0x4 - core index']
  #allocation1 [shape = 'u32[144,128]{1,0:T(1,128)}', space=vmem, size = 0x12000, scoped, tag = 'internal scratch']
  %s0 = inlined_call_operand.vmem [shape: f32[2,9,2,9,8], index: 0, kind: input, shape index: {}]
  %s1 = inlined_call_operand.vmem [shape: bf16[2,10,10,36], index: 1, kind: output, shape index: {}]
  %s2 = sld [smem:[#allocation0]]
  $region37: #{tpu_custom_call.1} parent=0
    _
  %s4 = ssub.s32 1, %s2
  %s5 = scalar_select 0, %s4, %s2
  loop: start=0, step=1, limit=4
  $region2: #{tpu_custom_call.1} parent=0 // loop_pre_header
    _
  $region3: #{tpu_custom_call.1} parent=0 // loop_header
    %s7 = sphi 0, %s11
    %p8 = scmp.ge.s32.totalorder %s7, 4
    %s17 = sphi 0, %s19
    %s20 = sphi 0, %s17
    %s21 = sphi 0, %s20
    %s37 = sphi 0, %s21
    %s43 = sphi 0, %s45
    %s46 = sphi 0, %s43
    %s47 = sphi 0, %s46
    %s63 = sphi 0, %s47
  $region4: #{tpu_custom_call.1} parent=0 // loop_header_branch
    %10 = sbr.rel (%p8) target = $region8
  $region5: #{tpu_custom_call.1} parent=0 // loop_body
    %s12 = ssub.s32 %s7, 1
    %s13 = ssub.s32 %s7, 2
    %s14 = sadd.s32 %s7, 1
    %s15 = ssub.s32 %s7, %s14
    %p16 = scmp.eq.s32.totalorder %s15, 0
    %s18 = sadd.s32 %s17, 1
    %s19 = scalar_select %p16, %s17, %s18
    %p22 = pneg %p16
    %p23 = scmp.eq.s32.totalorder %s7, 1
    %p24 = por %p22, %p23
    %p25 = scmp.ne.s32.totalorder %s17, %s20
    %p26 = scmp.eq.s32.totalorder %s7, 0
    %p27 = por %p25, %p26
    %p28 = scmp.ne.s32.totalorder %s17, %s20
    %p29 = scmp.eq.s32.totalorder %s12, 1
    %p30 = por %p28, %p29
    %p31 = scmp.ne.s32.totalorder %s20, %s21
    %p32 = scmp.eq.s32.totalorder %s12, 0
    %p33 = por %p31, %p32
    %p34 = scmp.ne.s32.totalorder %s20, %s21
    %p35 = scmp.eq.s32.totalorder %s13, 1
    %p36 = por %p34, %p35
    %p38 = scmp.ne.s32.totalorder %s21, %s37
    %p39 = scmp.eq.s32.totalorder %s13, 0
    %p40 = por %p38, %p39
    %s41 = ssub.s32 %s7, %s14
    %p42 = scmp.eq.s32.totalorder %s41, 0
    %s44 = sadd.s32 %s43, 1
    %s45 = scalar_select %p42, %s43, %s44
    %p48 = pneg %p42
    %p49 = scmp.eq.s32.totalorder %s7, 1
    %p50 = por %p48, %p49
    %p51 = scmp.ne.s32.totalorder %s43, %s46
    %p52 = scmp.eq.s32.totalorder %s7, 0
    %p53 = por %p51, %p52
    %p54 = scmp.ne.s32.totalorder %s43, %s46
    %p55 = scmp.eq.s32.totalorder %s12, 1
    %p56 = por %p54, %p55
    %p57 = scmp.ne.s32.totalorder %s46, %s47
    %p58 = scmp.eq.s32.totalorder %s12, 0
    %p59 = por %p57, %p58
    %p60 = scmp.ne.s32.totalorder %s46, %s47
    %p61 = scmp.eq.s32.totalorder %s13, 1
    %p62 = por %p60, %p61
    %p64 = scmp.ne.s32.totalorder %s47, %s63
    %p65 = scmp.eq.s32.totalorder %s13, 0
    %p66 = por %p64, %p65
    %p67 = scmp.le.s32.totalorder 1, %s7
    %p68 = scmp.lt.s32.totalorder %s7, 3
    %p69 = pnand %p67, %p68
    %p70 = pneg %p69
    // Predicated region
    $region9: #{tpu_custom_call.1} parent=5 // pred_check
      _
    $region10: #{tpu_custom_call.1} parent=5 // pred_check_branch
      %72 = sbr.rel (%p69) target = $region12
    $region11: #{tpu_custom_call.1} parent=5 // pred_region
      %s73 = ssub.s32 %s7, 1
    $region12: #{tpu_custom_call.1} parent=5 // pred_fallthru
      _
    %p74 = scmp.lt.s32.totalorder %s7, 2
    // Predicated region
    $region13: #{tpu_custom_call.1} parent=5 // pred_check
      %p75 = pneg %p74
    $region14: #{tpu_custom_call.1} parent=5 // pred_check_branch
      %77 = sbr.rel (%p75) target = $region16
    $region15: #{tpu_custom_call.1} parent=5 // pred_region
      // Predicated region
      $region17: #{tpu_custom_call.1} parent=15 // pred_check
        %p78 = pneg %p27
      $region18: #{tpu_custom_call.1} parent=15 // pred_check_branch
        %80 = sbr.rel (%p78) target = $region20
      $region19: #{tpu_custom_call.1} parent=15 // pred_region
        %p81 = scmp.lt.s32.totalorder %s7, 1
        %s82 = scalar_select %p81, %s7, 1
        %s83 = smul.addr %s82, 36
        %s84 = smul.addr %s83, 8
        %s85 = scalar_lea.vmem %s0, %s84
      $region20: #{tpu_custom_call.1} parent=15 // pred_fallthru
        _
    $region16: #{tpu_custom_call.1} parent=5 // pred_fallthru
      _
    %p86 = scmp.le.s32.totalorder 1, %s7
    %p87 = scmp.lt.s32.totalorder %s7, 3
    %p88 = pnand %p86, %p87
    %p89 = pneg %p88
    // Predicated region
    $region21: #{tpu_custom_call.1} parent=5 // pred_check
      _
    $region22: #{tpu_custom_call.1} parent=5 // pred_check_branch
      %91 = sbr.rel (%p88) target = $region24
    $region23: #{tpu_custom_call.1} parent=5 // pred_region
      %s92 = ssub.s32 %s7, 1
      %p93 = scmp.lt.s32.totalorder %s12, 1
      %s94 = scalar_select %p93, %s12, 1
      %s95 = smul.addr %s94, 36
      %s96 = smul.addr %s95, 8
      %s97 = scalar_lea.vmem %s0, %s96
      %p98 = pneg %p33
      %p99 = pneg %p30
      %p100 = pneg %p59
      %p101 = pneg %p56
      %p102 = scmp.lt.s32.totalorder %s12, 1
      %s103 = scalar_select %p102, %s12, 1
      %s104 = smul.addr %s103, 20
      %s105 = smul.addr %s104, 4
      %s106 = scalar_lea.vmem %s1, %s105
      %p107 = scmp.lt.s32.totalorder %s12, 1
      %s108 = scalar_select %p107, %s12, 1
      %s109 = smul.addr %s108, 36
      %s110 = smul.addr %s109, 8
      %s111 = scalar_lea.vmem %s0, %s110
      %p112 = scmp.lt.s32.totalorder %s12, 1
      %s113 = scalar_select %p112, %s12, 1
      %s114 = smul.addr %s113, 20
      %s115 = smul.addr %s114, 4
      %s116 = scalar_lea.vmem %s1, %s115
      %vm118 = vcmask 289792
      %119 = vst.msk [vmem:[%s116] sm:$0xf] %vm118, 0
      %vm120 = vcmask 286720
      %121 = vst.msk [vmem:[%s116 + $0x4] sm:$0x1] %vm120, 0
      %s122 = scalar_lea.vmem %s116, 8
      %vm123 = vcmask 286720
      %vm124 = vsmask.f32 256
      %vm125 = vmand %vm123, %vm124
      %v126 = vld [vmem:[%s122] sm:$0x1]
      %v127 = vsel %vm125, 0, %v126
      %128 = vst [vmem:[%s122] sm:$0x1] %v127
      %v129 = vld [vmem:[%s122 + $0x8] sm:$0x1]
      %v130 = vsel %vm125, 0, %v129
      %131 = vst [vmem:[%s122 + $0x8] sm:$0x1] %v130
      %v132 = vld [vmem:[%s122 + $0x10] sm:$0x1]
      %v133 = vsel %vm125, 0, %v132
      %134 = vst [vmem:[%s122 + $0x10] sm:$0x1] %v133
      %v135 = vld [vmem:[%s122 + $0x18] sm:$0x1]
      %v136 = vsel %vm125, 0, %v135
      %137 = vst [vmem:[%s122 + $0x18] sm:$0x1] %v136
      %v138 = vld [vmem:[%s122 + $0x20] sm:$0x1]
      %v139 = vsel %vm125, 0, %v138
      %140 = vst [vmem:[%s122 + $0x20] sm:$0x1] %v139
      %v141 = vld [vmem:[%s122 + $0x28] sm:$0x1]
      %v142 = vsel %vm125, 0, %v141
      %143 = vst [vmem:[%s122 + $0x28] sm:$0x1] %v142
      %v144 = vld [vmem:[%s122 + $0x30] sm:$0x1]
      %v145 = vsel %vm125, 0, %v144
      %146 = vst [vmem:[%s122 + $0x30] sm:$0x1] %v145
      %v147 = vld [vmem:[%s122 + $0x38] sm:$0x1]
      %v148 = vsel %vm125, 0, %v147
      %149 = vst [vmem:[%s122 + $0x38] sm:$0x1] %v148
      %s150 = scalar_lea.vmem %s116, 72
      %151 = vst.msk [vmem:[%s150] sm:$0xf] %vm118, 0
      %152 = vst.msk [vmem:[%s150 + $0x4] sm:$0x1] %vm120, 0
      %vm153 = vsmask.f32 7938
      %vm154 = vmand %vm123, %vm153
      %v155 = vld [vmem:[%s122 + $0x4] sm:$0x1]
      %v156 = vsel %vm154, 0, %v155
      %157 = vst [vmem:[%s122 + $0x4] sm:$0x1] %v156
      %v158 = vld [vmem:[%s122 + $0xc] sm:$0x1]
      %v159 = vsel %vm154, 0, %v158
      %160 = vst [vmem:[%s122 + $0xc] sm:$0x1] %v159
      %v161 = vld [vmem:[%s122 + $0x14] sm:$0x1]
      %v162 = vsel %vm154, 0, %v161
      %163 = vst [vmem:[%s122 + $0x14] sm:$0x1] %v162
      %v164 = vld [vmem:[%s122 + $0x1c] sm:$0x1]
      %v165 = vsel %vm154, 0, %v164
      %166 = vst [vmem:[%s122 + $0x1c] sm:$0x1] %v165
      %v167 = vld [vmem:[%s122 + $0x24] sm:$0x1]
      %v168 = vsel %vm154, 0, %v167
      %169 = vst [vmem:[%s122 + $0x24] sm:$0x1] %v168
      %v170 = vld [vmem:[%s122 + $0x2c] sm:$0x1]
      %v171 = vsel %vm154, 0, %v170
      %172 = vst [vmem:[%s122 + $0x2c] sm:$0x1] %v171
      %v173 = vld [vmem:[%s122 + $0x34] sm:$0x1]
      %v174 = vsel %vm154, 0, %v173
      %175 = vst [vmem:[%s122 + $0x34] sm:$0x1] %v174
      %v176 = vld [vmem:[%s122 + $0x3c] sm:$0x1]
      %v177 = vsel %vm154, 0, %v176
      %178 = vst [vmem:[%s122 + $0x3c] sm:$0x1] %v177
      %v179 = vld [vmem:[%s111] sm:$0xff]
      %v180 = vld [vmem:[%s111 + $0x20] sm:$0xff]
      %v181 = vld [vmem:[%s111 + $0x40] sm:$0xff]
      %v182 = vld [vmem:[%s111 + $0x60] sm:$0xff]
      %v183 = vld [vmem:[%s111 + $0x80] sm:$0xff]
      %v184 = vld [vmem:[%s111 + $0xa0] sm:$0xff]
      %v185 = vld [vmem:[%s111 + $0xc0] sm:$0xff]
      %v186 = vld [vmem:[%s111 + $0xe0] sm:$0xff]
      %v187 = vpack.c.bf16 %v179, %v179
      %v188 = vpack.c.bf16 %v180, %v180
      %v189 = vpack.c.bf16 %v181, %v181
      %v190 = vpack.c.bf16 %v182, %v182
      %v191 = vpack.c.bf16 %v183, %v183
      %v192 = vpack.c.bf16 %v184, %v184
      %v193 = vpack.c.bf16 %v185, %v185
      %v194 = vpack.c.bf16 %v186, %v186
      %v203 = vunpack.c.l.b16 %v187
      %v204 = vunpack.c.l.b16 %v188
      %v205 = vunpack.c.l.b16 %v189
      %v206 = vunpack.c.l.b16 %v190
      %v207 = vunpack.c.l.b16 %v191
      %v208 = vunpack.c.l.b16 %v192
      %v209 = vunpack.c.l.b16 %v193
      %v210 = vunpack.c.l.b16 %v194
      %v211 = vpack.c.b16 %v203, %v203
      %v212 = vpack.c.b16 %v204, %v204
      %v213 = vpack.c.b16 %v205, %v205
      %v214 = vpack.c.b16 %v206, %v206
      %v215 = vpack.c.b16 %v207, %v207
      %v216 = vpack.c.b16 %v208, %v208
      %v217 = vpack.c.b16 %v209, %v209
      %v218 = vpack.c.b16 %v210, %v210
      %v220 = vshrl.u32 %v211, 16
      %v222 = vrot.slane %v220, 7
      %v223 = vshll.u32 %v211, 16
      %v225 = vor.u32 %v222, %v223
      %v226 = vrot.slane %v222, 4
      %v228 = vshrl.u32 %v212, 16
      %v230 = vrot.slane %v228, 7
      %v231 = vshll.u32 %v212, 16
      %v233 = vor.u32 %v230, %v231
      %v234 = vrot.slane %v230, 4
      %v236 = vshrl.u32 %v213, 16
      %v238 = vrot.slane %v236, 7
      %v239 = vshll.u32 %v213, 16
      %v241 = vor.u32 %v238, %v239
      %v242 = vrot.slane %v238, 4
      %v244 = vshrl.u32 %v214, 16
      %v246 = vrot.slane %v244, 7
      %v247 = vshll.u32 %v214, 16
      %v249 = vor.u32 %v246, %v247
      %v250 = vrot.slane %v246, 4
      %v252 = vshrl.u32 %v215, 16
      %v254 = vrot.slane %v252, 7
      %v255 = vshll.u32 %v215, 16
      %v257 = vor.u32 %v254, %v255
      %v258 = vrot.slane %v254, 4
      %v260 = vshrl.u32 %v216, 16
      %v262 = vrot.slane %v260, 7
      %v263 = vshll.u32 %v216, 16
      %v265 = vor.u32 %v262, %v263
      %v266 = vrot.slane %v262, 4
      %v268 = vshrl.u32 %v217, 16
      %v270 = vrot.slane %v268, 7
      %v271 = vshll.u32 %v217, 16
      %v273 = vor.u32 %v270, %v271
      %v274 = vrot.slane %v270, 4
      %v276 = vshrl.u32 %v218, 16
      %v278 = vrot.slane %v276, 7
      %v279 = vshll.u32 %v218, 16
      %v281 = vor.u32 %v278, %v279
      %v282 = vrot.slane %v278, 4
      %vm299 = vcmask 60416
      %vm300 = vmand %vm299, %vm153
      %v301 = vld [vmem:[%s122] sm:$0xf]
      %v302 = vsel %vm300, %v225, %v301
      %303 = vst [vmem:[%s122] sm:$0xf] %v302
      %vm304 = vcmask 57344
      %vm305 = vmand %vm304, %vm124
      %v306 = vld [vmem:[%s122 + $0x4] sm:$0x1]
      %v307 = vsel %vm305, %v226, %v306
      %308 = vst [vmem:[%s122 + $0x4] sm:$0x1] %v307
      %v309 = vld [vmem:[%s122 + $0x8] sm:$0xf]
      %v310 = vsel %vm300, %v233, %v309
      %311 = vst [vmem:[%s122 + $0x8] sm:$0xf] %v310
      %v312 = vld [vmem:[%s122 + $0xc] sm:$0x1]
      %v313 = vsel %vm305, %v234, %v312
      %314 = vst [vmem:[%s122 + $0xc] sm:$0x1] %v313
      %v315 = vld [vmem:[%s122 + $0x10] sm:$0xf]
      %v316 = vsel %vm300, %v241, %v315
      %317 = vst [vmem:[%s122 + $0x10] sm:$0xf] %v316
      %v318 = vld [vmem:[%s122 + $0x14] sm:$0x1]
      %v319 = vsel %vm305, %v242, %v318
      %320 = vst [vmem:[%s122 + $0x14] sm:$0x1] %v319
      %v321 = vld [vmem:[%s122 + $0x18] sm:$0xf]
      %v322 = vsel %vm300, %v249, %v321
      %323 = vst [vmem:[%s122 + $0x18] sm:$0xf] %v322
      %v324 = vld [vmem:[%s122 + $0x1c] sm:$0x1]
      %v325 = vsel %vm305, %v250, %v324
      %326 = vst [vmem:[%s122 + $0x1c] sm:$0x1] %v325
      %v327 = vld [vmem:[%s122 + $0x20] sm:$0xf]
      %v328 = vsel %vm300, %v257, %v327
      %329 = vst [vmem:[%s122 + $0x20] sm:$0xf] %v328
      %v330 = vld [vmem:[%s122 + $0x24] sm:$0x1]
      %v331 = vsel %vm305, %v258, %v330
      %332 = vst [vmem:[%s122 + $0x24] sm:$0x1] %v331
      %v333 = vld [vmem:[%s122 + $0x28] sm:$0xf]
      %v334 = vsel %vm300, %v265, %v333
      %335 = vst [vmem:[%s122 + $0x28] sm:$0xf] %v334
      %v336 = vld [vmem:[%s122 + $0x2c] sm:$0x1]
      %v337 = vsel %vm305, %v266, %v336
      %338 = vst [vmem:[%s122 + $0x2c] sm:$0x1] %v337
      %v339 = vld [vmem:[%s122 + $0x30] sm:$0xf]
      %v340 = vsel %vm300, %v273, %v339
      %341 = vst [vmem:[%s122 + $0x30] sm:$0xf] %v340
      %v342 = vld [vmem:[%s122 + $0x34] sm:$0x1]
      %v343 = vsel %vm305, %v274, %v342
      %344 = vst [vmem:[%s122 + $0x34] sm:$0x1] %v343
      %v345 = vld [vmem:[%s122 + $0x38] sm:$0xf]
      %v346 = vsel %vm300, %v281, %v345
      %347 = vst [vmem:[%s122 + $0x38] sm:$0xf] %v346
      %v348 = vld [vmem:[%s122 + $0x3c] sm:$0x1]
      %v349 = vsel %vm305, %v282, %v348
      %350 = vst [vmem:[%s122 + $0x3c] sm:$0x1] %v349
      %v351 = vld [vmem:[%s111 + $0x1] sm:$0xff]
      %v352 = vld [vmem:[%s111 + $0x21] sm:$0xff]
      %v353 = vld [vmem:[%s111 + $0x41] sm:$0xff]
      %v354 = vld [vmem:[%s111 + $0x61] sm:$0xff]
      %v355 = vld [vmem:[%s111 + $0x81] sm:$0xff]
      %v356 = vld [vmem:[%s111 + $0xa1] sm:$0xff]
      %v357 = vld [vmem:[%s111 + $0xc1] sm:$0xff]
      %v358 = vld [vmem:[%s111 + $0xe1] sm:$0xff]
      %v359 = vpack.c.bf16 %v351, %v351
      %v360 = vpack.c.bf16 %v352, %v352
      %v361 = vpack.c.bf16 %v353, %v353
      %v362 = vpack.c.bf16 %v354, %v354
      %v363 = vpack.c.bf16 %v355, %v355
      %v364 = vpack.c.bf16 %v356, %v356
      %v365 = vpack.c.bf16 %v357, %v357
      %v366 = vpack.c.bf16 %v358, %v358
      %v375 = vunpack.c.l.b16 %v359
      %v376 = vunpack.c.l.b16 %v360
      %v377 = vunpack.c.l.b16 %v361
      %v378 = vunpack.c.l.b16 %v362
      %v379 = vunpack.c.l.b16 %v363
      %v380 = vunpack.c.l.b16 %v364
      %v381 = vunpack.c.l.b16 %v365
      %v382 = vunpack.c.l.b16 %v366
      %v383 = vpack.c.b16 %v375, %v375
      %v384 = vpack.c.b16 %v376, %v376
      %v385 = vpack.c.b16 %v377, %v377
      %v386 = vpack.c.b16 %v378, %v378
      %v387 = vpack.c.b16 %v379, %v379
      %v388 = vpack.c.b16 %v380, %v380
      %v389 = vpack.c.b16 %v381, %v381
      %v390 = vpack.c.b16 %v382, %v382
      %v392 = vshrl.u32 %v383, 16
      %v394 = vrot.slane %v392, 7
      %v395 = vshll.u32 %v383, 16
      %v397 = vor.u32 %v394, %v395
      %v398 = vrot.slane %v394, 4
      %v400 = vshrl.u32 %v384, 16
      %v402 = vrot.slane %v400, 7
      %v403 = vshll.u32 %v384, 16
      %v405 = vor.u32 %v402, %v403
      %v406 = vrot.slane %v402, 4
      %v408 = vshrl.u32 %v385, 16
      %v410 = vrot.slane %v408, 7
      %v411 = vshll.u32 %v385, 16
      %v413 = vor.u32 %v410, %v411
      %v414 = vrot.slane %v410, 4
      %v416 = vshrl.u32 %v386, 16
      %v418 = vrot.slane %v416, 7
      %v419 = vshll.u32 %v386, 16
      %v421 = vor.u32 %v418, %v419
      %v422 = vrot.slane %v418, 4
      %v424 = vshrl.u32 %v387, 16
      %v426 = vrot.slane %v424, 7
      %v427 = vshll.u32 %v387, 16
      %v429 = vor.u32 %v426, %v427
      %v430 = vrot.slane %v426, 4
      %v432 = vshrl.u32 %v388, 16
      %v434 = vrot.slane %v432, 7
      %v435 = vshll.u32 %v388, 16
      %v437 = vor.u32 %v434, %v435
      %v438 = vrot.slane %v434, 4
      %v440 = vshrl.u32 %v389, 16
      %v442 = vrot.slane %v440, 7
      %v443 = vshll.u32 %v389, 16
      %v445 = vor.u32 %v442, %v443
      %v446 = vrot.slane %v442, 4
      %v448 = vshrl.u32 %v390, 16
      %v450 = vrot.slane %v448, 7
      %v451 = vshll.u32 %v390, 16
      %v453 = vor.u32 %v450, %v451
      %v454 = vrot.slane %v450, 4
      %455 = vrot.lane.b32.xlu0 %v397, 8
      %v456 = vpop.permute.xlu0 %455
      %457 = vrot.lane.b32.xlu0 %v398, 8
      %v458 = vpop.permute.xlu0 %457
      %459 = vrot.lane.b32.xlu0 %v405, 8
      %v460 = vpop.permute.xlu0 %459
      %461 = vrot.lane.b32.xlu0 %v406, 8
      %v462 = vpop.permute.xlu0 %461
      %463 = vrot.lane.b32.xlu0 %v413, 8
      %v464 = vpop.permute.xlu0 %463
      %465 = vrot.lane.b32.xlu0 %v414, 8
      %v466 = vpop.permute.xlu0 %465
      %467 = vrot.lane.b32.xlu0 %v421, 8
      %v468 = vpop.permute.xlu0 %467
      %469 = vrot.lane.b32.xlu0 %v422, 8
      %v470 = vpop.permute.xlu0 %469
      %471 = vrot.lane.b32.xlu0 %v429, 8
      %v472 = vpop.permute.xlu0 %471
      %473 = vrot.lane.b32.xlu0 %v430, 8
      %v474 = vpop.permute.xlu0 %473
      %475 = vrot.lane.b32.xlu0 %v437, 8
      %v476 = vpop.permute.xlu0 %475
      %477 = vrot.lane.b32.xlu0 %v438, 8
      %v478 = vpop.permute.xlu0 %477
      %479 = vrot.lane.b32.xlu0 %v445, 8
      %v480 = vpop.permute.xlu0 %479
      %481 = vrot.lane.b32.xlu0 %v446, 8
      %v482 = vpop.permute.xlu0 %481
      %483 = vrot.lane.b32.xlu0 %v453, 8
      %v484 = vpop.permute.xlu0 %483
      %485 = vrot.lane.b32.xlu0 %v454, 8
      %v486 = vpop.permute.xlu0 %485
      %vm503 = vcmask 93248
      %vm504 = vmand %vm503, %vm153
      %v505 = vld [vmem:[%s122] sm:$0xf]
      %v506 = vsel %vm504, %v456, %v505
      %507 = vst [vmem:[%s122] sm:$0xf] %v506
      %vm508 = vcmask 90176
      %vm509 = vmand %vm508, %vm124
      %v510 = vld [vmem:[%s122 + $0x4] sm:$0x1]
      %v511 = vsel %vm509, %v458, %v510
      %512 = vst [vmem:[%s122 + $0x4] sm:$0x1] %v511
      %v513 = vld [vmem:[%s122 + $0x8] sm:$0xf]
      %v514 = vsel %vm504, %v460, %v513
      %515 = vst [vmem:[%s122 + $0x8] sm:$0xf] %v514
      %v516 = vld [vmem:[%s122 + $0xc] sm:$0x1]
      %v517 = vsel %vm509, %v462, %v516
      %518 = vst [vmem:[%s122 + $0xc] sm:$0x1] %v517
      %v519 = vld [vmem:[%s122 + $0x10] sm:$0xf]
      %v520 = vsel %vm504, %v464, %v519
      %521 = vst [vmem:[%s122 + $0x10] sm:$0xf] %v520
      %v522 = vld [vmem:[%s122 + $0x14] sm:$0x1]
      %v523 = vsel %vm509, %v466, %v522
      %524 = vst [vmem:[%s122 + $0x14] sm:$0x1] %v523
      %v525 = vld [vmem:[%s122 + $0x18] sm:$0xf]
      %v526 = vsel %vm504, %v468, %v525
      %527 = vst [vmem:[%s122 + $0x18] sm:$0xf] %v526
      %v528 = vld [vmem:[%s122 + $0x1c] sm:$0x1]
      %v529 = vsel %vm509, %v470, %v528
      %530 = vst [vmem:[%s122 + $0x1c] sm:$0x1] %v529
      %v531 = vld [vmem:[%s122 + $0x20] sm:$0xf]
      %v532 = vsel %vm504, %v472, %v531
      %533 = vst [vmem:[%s122 + $0x20] sm:$0xf] %v532
      %v534 = vld [vmem:[%s122 + $0x24] sm:$0x1]
      %v535 = vsel %vm509, %v474, %v534
      %536 = vst [vmem:[%s122 + $0x24] sm:$0x1] %v535
      %v537 = vld [vmem:[%s122 + $0x28] sm:$0xf]
      %v538 = vsel %vm504, %v476, %v537
      %539 = vst [vmem:[%s122 + $0x28] sm:$0xf] %v538
      %v540 = vld [vmem:[%s122 + $0x2c] sm:$0x1]
      %v541 = vsel %vm509, %v478, %v540
      %542 = vst [vmem:[%s122 + $0x2c] sm:$0x1] %v541
      %v543 = vld [vmem:[%s122 + $0x30] sm:$0xf]
      %v544 = vsel %vm504, %v480, %v543
      %545 = vst [vmem:[%s122 + $0x30] sm:$0xf] %v544
      %v546 = vld [vmem:[%s122 + $0x34] sm:$0x1]
      %v547 = vsel %vm509, %v482, %v546
      %548 = vst [vmem:[%s122 + $0x34] sm:$0x1] %v547
      %v549 = vld [vmem:[%s122 + $0x38] sm:$0xf]
      %v550 = vsel %vm504, %v484, %v549
      %551 = vst [vmem:[%s122 + $0x38] sm:$0xf] %v550
      %v552 = vld [vmem:[%s122 + $0x3c] sm:$0x1]
      %v553 = vsel %vm509, %v486, %v552
      %554 = vst [vmem:[%s122 + $0x3c] sm:$0x1] %v553
      %s555 = scalar_lea.vmem %s111, 16
      %v556 = vld [vmem:[%s555] sm:$0xff]
      %v557 = vld [vmem:[%s555 + $0x20] sm:$0xff]
      %v558 = vld [vmem:[%s555 + $0x40] sm:$0xff]
      %v559 = vld [vmem:[%s555 + $0x60] sm:$0xff]
      %v560 = vld [vmem:[%s555 + $0x80] sm:$0xff]
      %v561 = vld [vmem:[%s555 + $0xa0] sm:$0xff]
      %v562 = vld [vmem:[%s555 + $0xc0] sm:$0xff]
      %v563 = vld [vmem:[%s555 + $0xe0] sm:$0xff]
      %v564 = vpack.c.bf16 %v556, %v556
      %v565 = vpack.c.bf16 %v557, %v557
      %v566 = vpack.c.bf16 %v558, %v558
      %v567 = vpack.c.bf16 %v559, %v559
      %v568 = vpack.c.bf16 %v560, %v560
      %v569 = vpack.c.bf16 %v561, %v561
      %v570 = vpack.c.bf16 %v562, %v562
      %v571 = vpack.c.bf16 %v563, %v563
      %v580 = vunpack.c.l.b16 %v564
      %v581 = vunpack.c.l.b16 %v565
      %v582 = vunpack.c.l.b16 %v566
      %v583 = vunpack.c.l.b16 %v567
      %v584 = vunpack.c.l.b16 %v568
      %v585 = vunpack.c.l.b16 %v569
      %v586 = vunpack.c.l.b16 %v570
      %v587 = vunpack.c.l.b16 %v571
      %v588 = vpack.c.b16 %v580, %v580
      %v589 = vpack.c.b16 %v581, %v581
      %v590 = vpack.c.b16 %v582, %v582
      %v591 = vpack.c.b16 %v583, %v583
      %v592 = vpack.c.b16 %v584, %v584
      %v593 = vpack.c.b16 %v585, %v585
      %v594 = vpack.c.b16 %v586, %v586
      %v595 = vpack.c.b16 %v587, %v587
      %v597 = vshrl.u32 %v588, 16
      %v599 = vrot.slane %v597, 7
      %v600 = vshll.u32 %v588, 16
      %v602 = vor.u32 %v599, %v600
      %v603 = vrot.slane %v599, 4
      %v605 = vshrl.u32 %v589, 16
      %v607 = vrot.slane %v605, 7
      %v608 = vshll.u32 %v589, 16
      %v610 = vor.u32 %v607, %v608
      %v611 = vrot.slane %v607, 4
      %v613 = vshrl.u32 %v590, 16
      %v615 = vrot.slane %v613, 7
      %v616 = vshll.u32 %v590, 16
      %v618 = vor.u32 %v615, %v616
      %v619 = vrot.slane %v615, 4
      %v621 = vshrl.u32 %v591, 16
      %v623 = vrot.slane %v621, 7
      %v624 = vshll.u32 %v591, 16
      %v626 = vor.u32 %v623, %v624
      %v627 = vrot.slane %v623, 4
      %v629 = vshrl.u32 %v592, 16
      %v631 = vrot.slane %v629, 7
      %v632 = vshll.u32 %v592, 16
      %v634 = vor.u32 %v631, %v632
      %v635 = vrot.slane %v631, 4
      %v637 = vshrl.u32 %v593, 16
      %v639 = vrot.slane %v637, 7
      %v640 = vshll.u32 %v593, 16
      %v642 = vor.u32 %v639, %v640
      %v643 = vrot.slane %v639, 4
      %v645 = vshrl.u32 %v594, 16
      %v647 = vrot.slane %v645, 7
      %v648 = vshll.u32 %v594, 16
      %v650 = vor.u32 %v647, %v648
      %v651 = vrot.slane %v647, 4
      %v653 = vshrl.u32 %v595, 16
      %v655 = vrot.slane %v653, 7
      %v656 = vshll.u32 %v595, 16
      %v658 = vor.u32 %v655, %v656
      %v659 = vrot.slane %v655, 4
      %660 = vrot.lane.b32.xlu0 %v602, 12
      %v661 = vpop.permute.xlu0 %660
      %662 = vrot.lane.b32.xlu0 %v603, 12
      %v663 = vpop.permute.xlu0 %662
      %664 = vrot.lane.b32.xlu0 %v610, 12
      %v665 = vpop.permute.xlu0 %664
      %666 = vrot.lane.b32.xlu0 %v611, 12
      %v667 = vpop.permute.xlu0 %666
      %668 = vrot.lane.b32.xlu0 %v618, 12
      %v669 = vpop.permute.xlu0 %668
      %670 = vrot.lane.b32.xlu0 %v619, 12
      %v671 = vpop.permute.xlu0 %670
      %672 = vrot.lane.b32.xlu0 %v626, 12
      %v673 = vpop.permute.xlu0 %672
      %674 = vrot.lane.b32.xlu0 %v627, 12
      %v675 = vpop.permute.xlu0 %674
      %676 = vrot.lane.b32.xlu0 %v634, 12
      %v677 = vpop.permute.xlu0 %676
      %678 = vrot.lane.b32.xlu0 %v635, 12
      %v679 = vpop.permute.xlu0 %678
      %680 = vrot.lane.b32.xlu0 %v642, 12
      %v681 = vpop.permute.xlu0 %680
      %682 = vrot.lane.b32.xlu0 %v643, 12
      %v683 = vpop.permute.xlu0 %682
      %684 = vrot.lane.b32.xlu0 %v650, 12
      %v685 = vpop.permute.xlu0 %684
      %686 = vrot.lane.b32.xlu0 %v651, 12
      %v687 = vpop.permute.xlu0 %686
      %688 = vrot.lane.b32.xlu0 %v658, 12
      %v689 = vpop.permute.xlu0 %688
      %690 = vrot.lane.b32.xlu0 %v659, 12
      %v691 = vpop.permute.xlu0 %690
      %vm708 = vcmask 158816
      %vm709 = vmand %vm708, %vm153
      %v710 = vld [vmem:[%s122] sm:$0xf]
      %v711 = vsel %vm709, %v661, %v710
      %712 = vst [vmem:[%s122] sm:$0xf] %v711
      %vm713 = vcmask 155744
      %vm714 = vmand %vm713, %vm124
      %v715 = vld [vmem:[%s122 + $0x4] sm:$0x1]
      %v716 = vsel %vm714, %v663, %v715
      %717 = vst [vmem:[%s122 + $0x4] sm:$0x1] %v716
      %v718 = vld [vmem:[%s122 + $0x8] sm:$0xf]
      %v719 = vsel %vm709, %v665, %v718
      %720 = vst [vmem:[%s122 + $0x8] sm:$0xf] %v719
      %v721 = vld [vmem:[%s122 + $0xc] sm:$0x1]
      %v722 = vsel %vm714, %v667, %v721
      %723 = vst [vmem:[%s122 + $0xc] sm:$0x1] %v722
      %v724 = vld [vmem:[%s122 + $0x10] sm:$0xf]
      %v725 = vsel %vm709, %v669, %v724
      %726 = vst [vmem:[%s122 + $0x10] sm:$0xf] %v725
      %v727 = vld [vmem:[%s122 + $0x14] sm:$0x1]
      %v728 = vsel %vm714, %v671, %v727
      %729 = vst [vmem:[%s122 + $0x14] sm:$0x1] %v728
      %v730 = vld [vmem:[%s122 + $0x18] sm:$0xf]
      %v731 = vsel %vm709, %v673, %v730
      %732 = vst [vmem:[%s122 + $0x18] sm:$0xf] %v731
      %v733 = vld [vmem:[%s122 + $0x1c] sm:$0x1]
      %v734 = vsel %vm714, %v675, %v733
      %735 = vst [vmem:[%s122 + $0x1c] sm:$0x1] %v734
      %v736 = vld [vmem:[%s122 + $0x20] sm:$0xf]
      %v737 = vsel %vm709, %v677, %v736
      %738 = vst [vmem:[%s122 + $0x20] sm:$0xf] %v737
      %v739 = vld [vmem:[%s122 + $0x24] sm:$0x1]
      %v740 = vsel %vm714, %v679, %v739
      %741 = vst [vmem:[%s122 + $0x24] sm:$0x1] %v740
      %v742 = vld [vmem:[%s122 + $0x28] sm:$0xf]
      %v743 = vsel %vm709, %v681, %v742
      %744 = vst [vmem:[%s122 + $0x28] sm:$0xf] %v743
      %v745 = vld [vmem:[%s122 + $0x2c] sm:$0x1]
      %v746 = vsel %vm714, %v683, %v745
      %747 = vst [vmem:[%s122 + $0x2c] sm:$0x1] %v746
      %v748 = vld [vmem:[%s122 + $0x30] sm:$0xf]
      %v749 = vsel %vm709, %v685, %v748
      %750 = vst [vmem:[%s122 + $0x30] sm:$0xf] %v749
      %v751 = vld [vmem:[%s122 + $0x34] sm:$0x1]
      %v752 = vsel %vm714, %v687, %v751
      %753 = vst [vmem:[%s122 + $0x34] sm:$0x1] %v752
      %v754 = vld [vmem:[%s122 + $0x38] sm:$0xf]
      %v755 = vsel %vm709, %v689, %v754
      %756 = vst [vmem:[%s122 + $0x38] sm:$0xf] %v755
      %v757 = vld [vmem:[%s122 + $0x3c] sm:$0x1]
      %v758 = vsel %vm714, %v691, %v757
      %759 = vst [vmem:[%s122 + $0x3c] sm:$0x1] %v758
      %v760 = vld [vmem:[%s555 + $0x1] sm:$0xff]
      %v761 = vld [vmem:[%s555 + $0x21] sm:$0xff]
      %v762 = vld [vmem:[%s555 + $0x41] sm:$0xff]
      %v763 = vld [vmem:[%s555 + $0x61] sm:$0xff]
      %v764 = vld [vmem:[%s555 + $0x81] sm:$0xff]
      %v765 = vld [vmem:[%s555 + $0xa1] sm:$0xff]
      %v766 = vld [vmem:[%s555 + $0xc1] sm:$0xff]
      %v767 = vld [vmem:[%s555 + $0xe1] sm:$0xff]
      %v768 = vpack.c.bf16 %v760, %v760
      %v769 = vpack.c.bf16 %v761, %v761
      %v770 = vpack.c.bf16 %v762, %v762
      %v771 = vpack.c.bf16 %v763, %v763
      %v772 = vpack.c.bf16 %v764, %v764
      %v773 = vpack.c.bf16 %v765, %v765
      %v774 = vpack.c.bf16 %v766, %v766
      %v775 = vpack.c.bf16 %v767, %v767
      %v784 = vunpack.c.l.b16 %v768
      %v785 = vunpack.c.l.b16 %v769
      %v786 = vunpack.c.l.b16 %v770
      %v787 = vunpack.c.l.b16 %v771
      %v788 = vunpack.c.l.b16 %v772
      %v789 = vunpack.c.l.b16 %v773
      %v790 = vunpack.c.l.b16 %v774
      %v791 = vunpack.c.l.b16 %v775
      %v792 = vpack.c.b16 %v784, %v784
      %v793 = vpack.c.b16 %v785, %v785
      %v794 = vpack.c.b16 %v786, %v786
      %v795 = vpack.c.b16 %v787, %v787
      %v796 = vpack.c.b16 %v788, %v788
      %v797 = vpack.c.b16 %v789, %v789
      %v798 = vpack.c.b16 %v790, %v790
      %v799 = vpack.c.b16 %v791, %v791
      %v801 = vshrl.u32 %v792, 16
      %v803 = vrot.slane %v801, 7
      %v804 = vshll.u32 %v792, 16
      %v806 = vor.u32 %v803, %v804
      %v807 = vrot.slane %v803, 4
      %v809 = vshrl.u32 %v793, 16
      %v811 = vrot.slane %v809, 7
      %v812 = vshll.u32 %v793, 16
      %v814 = vor.u32 %v811, %v812
      %v815 = vrot.slane %v811, 4
      %v817 = vshrl.u32 %v794, 16
      %v819 = vrot.slane %v817, 7
      %v820 = vshll.u32 %v794, 16
      %v822 = vor.u32 %v819, %v820
      %v823 = vrot.slane %v819, 4
      %v825 = vshrl.u32 %v795, 16
      %v827 = vrot.slane %v825, 7
      %v828 = vshll.u32 %v795, 16
      %v830 = vor.u32 %v827, %v828
      %v831 = vrot.slane %v827, 4
      %v833 = vshrl.u32 %v796, 16
      %v835 = vrot.slane %v833, 7
      %v836 = vshll.u32 %v796, 16
      %v838 = vor.u32 %v835, %v836
      %v839 = vrot.slane %v835, 4
      %v841 = vshrl.u32 %v797, 16
      %v843 = vrot.slane %v841, 7
      %v844 = vshll.u32 %v797, 16
      %v846 = vor.u32 %v843, %v844
      %v847 = vrot.slane %v843, 4
      %v849 = vshrl.u32 %v798, 16
      %v851 = vrot.slane %v849, 7
      %v852 = vshll.u32 %v798, 16
      %v854 = vor.u32 %v851, %v852
      %v855 = vrot.slane %v851, 4
      %v857 = vshrl.u32 %v799, 16
      %v859 = vrot.slane %v857, 7
      %v860 = vshll.u32 %v799, 16
      %v862 = vor.u32 %v859, %v860
      %v863 = vrot.slane %v859, 4
      %864 = vrot.lane.b32.xlu0 %v806, 20
      %v865 = vpop.permute.xlu0 %864
      %866 = vrot.lane.b32.xlu0 %v807, 20
      %v867 = vpop.permute.xlu0 %866
      %868 = vrot.lane.b32.xlu0 %v814, 20
      %v869 = vpop.permute.xlu0 %868
      %870 = vrot.lane.b32.xlu0 %v815, 20
      %v871 = vpop.permute.xlu0 %870
      %872 = vrot.lane.b32.xlu0 %v822, 20
      %v873 = vpop.permute.xlu0 %872
      %874 = vrot.lane.b32.xlu0 %v823, 20
      %v875 = vpop.permute.xlu0 %874
      %876 = vrot.lane.b32.xlu0 %v830, 20
      %v877 = vpop.permute.xlu0 %876
      %878 = vrot.lane.b32.xlu0 %v831, 20
      %v879 = vpop.permute.xlu0 %878
      %880 = vrot.lane.b32.xlu0 %v838, 20
      %v881 = vpop.permute.xlu0 %880
      %882 = vrot.lane.b32.xlu0 %v839, 20
      %v883 = vpop.permute.xlu0 %882
      %884 = vrot.lane.b32.xlu0 %v846, 20
      %v885 = vpop.permute.xlu0 %884
      %886 = vrot.lane.b32.xlu0 %v847, 20
      %v887 = vpop.permute.xlu0 %886
      %888 = vrot.lane.b32.xlu0 %v854, 20
      %v889 = vpop.permute.xlu0 %888
      %890 = vrot.lane.b32.xlu0 %v855, 20
      %v891 = vpop.permute.xlu0 %890
      %892 = vrot.lane.b32.xlu0 %v862, 20
      %v893 = vpop.permute.xlu0 %892
      %894 = vrot.lane.b32.xlu0 %v863, 20
      %v895 = vpop.permute.xlu0 %894
      %vm912 = vcmask 191648
      %vm913 = vmand %vm912, %vm153
      %v914 = vld [vmem:[%s122] sm:$0xf]
      %v915 = vsel %vm913, %v865, %v914
      %916 = vst [vmem:[%s122] sm:$0xf] %v915
      %vm917 = vcmask 188576
      %vm918 = vmand %vm917, %vm124
      %v919 = vld [vmem:[%s122 + $0x4] sm:$0x1]
      %v920 = vsel %vm918, %v867, %v919
      %921 = vst [vmem:[%s122 + $0x4] sm:$0x1] %v920
      %v922 = vld [vmem:[%s122 + $0x8] sm:$0xf]
      %v923 = vsel %vm913, %v869, %v922
      %924 = vst [vmem:[%s122 + $0x8] sm:$0xf] %v923
      %v925 = vld [vmem:[%s122 + $0xc] sm:$0x1]
      %v926 = vsel %vm918, %v871, %v925
      %927 = vst [vmem:[%s122 + $0xc] sm:$0x1] %v926
      %v928 = vld [vmem:[%s122 + $0x10] sm:$0xf]
      %v929 = vsel %vm913, %v873, %v928
      %930 = vst [vmem:[%s122 + $0x10] sm:$0xf] %v929
      %v931 = vld [vmem:[%s122 + $0x14] sm:$0x1]
      %v932 = vsel %vm918, %v875, %v931
      %933 = vst [vmem:[%s122 + $0x14] sm:$0x1] %v932
      %v934 = vld [vmem:[%s122 + $0x18] sm:$0xf]
      %v935 = vsel %vm913, %v877, %v934
      %936 = vst [vmem:[%s122 + $0x18] sm:$0xf] %v935
      %v937 = vld [vmem:[%s122 + $0x1c] sm:$0x1]
      %v938 = vsel %vm918, %v879, %v937
      %939 = vst [vmem:[%s122 + $0x1c] sm:$0x1] %v938
      %v940 = vld [vmem:[%s122 + $0x20] sm:$0xf]
      %v941 = vsel %vm913, %v881, %v940
      %942 = vst [vmem:[%s122 + $0x20] sm:$0xf] %v941
      %v943 = vld [vmem:[%s122 + $0x24] sm:$0x1]
      %v944 = vsel %vm918, %v883, %v943
      %945 = vst [vmem:[%s122 + $0x24] sm:$0x1] %v944
      %v946 = vld [vmem:[%s122 + $0x28] sm:$0xf]
      %v947 = vsel %vm913, %v885, %v946
      %948 = vst [vmem:[%s122 + $0x28] sm:$0xf] %v947
      %v949 = vld [vmem:[%s122 + $0x2c] sm:$0x1]
      %v950 = vsel %vm918, %v887, %v949
      %951 = vst [vmem:[%s122 + $0x2c] sm:$0x1] %v950
      %v952 = vld [vmem:[%s122 + $0x30] sm:$0xf]
      %v953 = vsel %vm913, %v889, %v952
      %954 = vst [vmem:[%s122 + $0x30] sm:$0xf] %v953
      %v955 = vld [vmem:[%s122 + $0x34] sm:$0x1]
      %v956 = vsel %vm918, %v891, %v955
      %957 = vst [vmem:[%s122 + $0x34] sm:$0x1] %v956
      %v958 = vld [vmem:[%s122 + $0x38] sm:$0xf]
      %v959 = vsel %vm913, %v893, %v958
      %960 = vst [vmem:[%s122 + $0x38] sm:$0xf] %v959
      %v961 = vld [vmem:[%s122 + $0x3c] sm:$0x1]
      %v962 = vsel %vm918, %v895, %v961
      %963 = vst [vmem:[%s122 + $0x3c] sm:$0x1] %v962
      %s964 = scalar_lea.vmem %s111, 32
      %v965 = vld [vmem:[%s964] sm:$0xff]
      %v966 = vld [vmem:[%s964 + $0x20] sm:$0xff]
      %v967 = vld [vmem:[%s964 + $0x40] sm:$0xff]
      %v968 = vld [vmem:[%s964 + $0x60] sm:$0xff]
      %v969 = vld [vmem:[%s964 + $0x80] sm:$0xff]
      %v970 = vld [vmem:[%s964 + $0xa0] sm:$0xff]
      %v971 = vld [vmem:[%s964 + $0xc0] sm:$0xff]
      %v972 = vld [vmem:[%s964 + $0xe0] sm:$0xff]
      %v973 = vpack.c.bf16 %v965, %v965
      %v974 = vpack.c.bf16 %v966, %v966
      %v975 = vpack.c.bf16 %v967, %v967
      %v976 = vpack.c.bf16 %v968, %v968
      %v977 = vpack.c.bf16 %v969, %v969
      %v978 = vpack.c.bf16 %v970, %v970
      %v979 = vpack.c.bf16 %v971, %v971
      %v980 = vpack.c.bf16 %v972, %v972
      %v989 = vunpack.c.l.b16 %v973
      %v990 = vunpack.c.l.b16 %v974
      %v991 = vunpack.c.l.b16 %v975
      %v992 = vunpack.c.l.b16 %v976
      %v993 = vunpack.c.l.b16 %v977
      %v994 = vunpack.c.l.b16 %v978
      %v995 = vunpack.c.l.b16 %v979
      %v996 = vunpack.c.l.b16 %v980
      %v997 = vpack.c.b16 %v989, %v989
      %v998 = vpack.c.b16 %v990, %v990
      %v999 = vpack.c.b16 %v991, %v991
      %v1000 = vpack.c.b16 %v992, %v992
      %v1001 = vpack.c.b16 %v993, %v993
      %v1002 = vpack.c.b16 %v994, %v994
      %v1003 = vpack.c.b16 %v995, %v995
      %v1004 = vpack.c.b16 %v996, %v996
      %v1006 = vshrl.u32 %v997, 16
      %v1008 = vrot.slane %v1006, 7
      %v1009 = vshll.u32 %v997, 16
      %v1011 = vor.u32 %v1008, %v1009
      %v1012 = vrot.slane %v1008, 4
      %v1014 = vshrl.u32 %v998, 16
      %v1016 = vrot.slane %v1014, 7
      %v1017 = vshll.u32 %v998, 16
      %v1019 = vor.u32 %v1016, %v1017
      %v1020 = vrot.slane %v1016, 4
      %v1022 = vshrl.u32 %v999, 16
      %v1024 = vrot.slane %v1022, 7
      %v1025 = vshll.u32 %v999, 16
      %v1027 = vor.u32 %v1024, %v1025
      %v1028 = vrot.slane %v1024, 4
      %v1030 = vshrl.u32 %v1000, 16
      %v1032 = vrot.slane %v1030, 7
      %v1033 = vshll.u32 %v1000, 16
      %v1035 = vor.u32 %v1032, %v1033
      %v1036 = vrot.slane %v1032, 4
      %v1038 = vshrl.u32 %v1001, 16
      %v1040 = vrot.slane %v1038, 7
      %v1041 = vshll.u32 %v1001, 16
      %v1043 = vor.u32 %v1040, %v1041
      %v1044 = vrot.slane %v1040, 4
      %v1046 = vshrl.u32 %v1002, 16
      %v1048 = vrot.slane %v1046, 7
      %v1049 = vshll.u32 %v1002, 16
      %v1051 = vor.u32 %v1048, %v1049
      %v1052 = vrot.slane %v1048, 4
      %v1054 = vshrl.u32 %v1003, 16
      %v1056 = vrot.slane %v1054, 7
      %v1057 = vshll.u32 %v1003, 16
      %v1059 = vor.u32 %v1056, %v1057
      %v1060 = vrot.slane %v1056, 4
      %v1062 = vshrl.u32 %v1004, 16
      %v1064 = vrot.slane %v1062, 7
      %v1065 = vshll.u32 %v1004, 16
      %v1067 = vor.u32 %v1064, %v1065
      %v1068 = vrot.slane %v1064, 4
      %1069 = vrot.lane.b32.xlu0 %v1011, 24
      %v1070 = vpop.permute.xlu0 %1069
      %1071 = vrot.lane.b32.xlu0 %v1012, 24
      %v1072 = vpop.permute.xlu0 %1071
      %1073 = vrot.lane.b32.xlu0 %v1019, 24
      %v1074 = vpop.permute.xlu0 %1073
      %1075 = vrot.lane.b32.xlu0 %v1020, 24
      %v1076 = vpop.permute.xlu0 %1075
      %1077 = vrot.lane.b32.xlu0 %v1027, 24
      %v1078 = vpop.permute.xlu0 %1077
      %1079 = vrot.lane.b32.xlu0 %v1028, 24
      %v1080 = vpop.permute.xlu0 %1079
      %1081 = vrot.lane.b32.xlu0 %v1035, 24
      %v1082 = vpop.permute.xlu0 %1081
      %1083 = vrot.lane.b32.xlu0 %v1036, 24
      %v1084 = vpop.permute.xlu0 %1083
      %1085 = vrot.lane.b32.xlu0 %v1043, 24
      %v1086 = vpop.permute.xlu0 %1085
      %1087 = vrot.lane.b32.xlu0 %v1044, 24
      %v1088 = vpop.permute.xlu0 %1087
      %1089 = vrot.lane.b32.xlu0 %v1051, 24
      %v1090 = vpop.permute.xlu0 %1089
      %1091 = vrot.lane.b32.xlu0 %v1052, 24
      %v1092 = vpop.permute.xlu0 %1091
      %1093 = vrot.lane.b32.xlu0 %v1059, 24
      %v1094 = vpop.permute.xlu0 %1093
      %1095 = vrot.lane.b32.xlu0 %v1060, 24
      %v1096 = vpop.permute.xlu0 %1095
      %1097 = vrot.lane.b32.xlu0 %v1067, 24
      %v1098 = vpop.permute.xlu0 %1097
      %1099 = vrot.lane.b32.xlu0 %v1068, 24
      %v1100 = vpop.permute.xlu0 %1099
      %vm1117 = vcmask 257216
      %vm1118 = vmand %vm1117, %vm153
      %v1119 = vld [vmem:[%s122] sm:$0xf]
      %v1120 = vsel %vm1118, %v1070, %v1119
      %1121 = vst [vmem:[%s122] sm:$0xf] %v1120
      %vm1122 = vcmask 254144
      %vm1123 = vmand %vm1122, %vm124
      %v1124 = vld [vmem:[%s122 + $0x4] sm:$0x1]
      %v1125 = vsel %vm1123, %v1072, %v1124
      %1126 = vst [vmem:[%s122 + $0x4] sm:$0x1] %v1125
      %v1127 = vld [vmem:[%s122 + $0x8] sm:$0xf]
      %v1128 = vsel %vm1118, %v1074, %v1127
      %1129 = vst [vmem:[%s122 + $0x8] sm:$0xf] %v1128
      %v1130 = vld [vmem:[%s122 + $0xc] sm:$0x1]
      %v1131 = vsel %vm1123, %v1076, %v1130
      %1132 = vst [vmem:[%s122 + $0xc] sm:$0x1] %v1131
      %v1133 = vld [vmem:[%s122 + $0x10] sm:$0xf]
      %v1134 = vsel %vm1118, %v1078, %v1133
      %1135 = vst [vmem:[%s122 + $0x10] sm:$0xf] %v1134
      %v1136 = vld [vmem:[%s122 + $0x14] sm:$0x1]
      %v1137 = vsel %vm1123, %v1080, %v1136
      %1138 = vst [vmem:[%s122 + $0x14] sm:$0x1] %v1137
      %v1139 = vld [vmem:[%s122 + $0x18] sm:$0xf]
      %v1140 = vsel %vm1118, %v1082, %v1139
      %1141 = vst [vmem:[%s122 + $0x18] sm:$0xf] %v1140
      %v1142 = vld [vmem:[%s122 + $0x1c] sm:$0x1]
      %v1143 = vsel %vm1123, %v1084, %v1142
      %1144 = vst [vmem:[%s122 + $0x1c] sm:$0x1] %v1143
      %v1145 = vld [vmem:[%s122 + $0x20] sm:$0xf]
      %v1146 = vsel %vm1118, %v1086, %v1145
      %1147 = vst [vmem:[%s122 + $0x20] sm:$0xf] %v1146
      %v1148 = vld [vmem:[%s122 + $0x24] sm:$0x1]
      %v1149 = vsel %vm1123, %v1088, %v1148
      %1150 = vst [vmem:[%s122 + $0x24] sm:$0x1] %v1149
      %v1151 = vld [vmem:[%s122 + $0x28] sm:$0xf]
      %v1152 = vsel %vm1118, %v1090, %v1151
      %1153 = vst [vmem:[%s122 + $0x28] sm:$0xf] %v1152
      %v1154 = vld [vmem:[%s122 + $0x2c] sm:$0x1]
      %v1155 = vsel %vm1123, %v1092, %v1154
      %1156 = vst [vmem:[%s122 + $0x2c] sm:$0x1] %v1155
      %v1157 = vld [vmem:[%s122 + $0x30] sm:$0xf]
      %v1158 = vsel %vm1118, %v1094, %v1157
      %1159 = vst [vmem:[%s122 + $0x30] sm:$0xf] %v1158
      %v1160 = vld [vmem:[%s122 + $0x34] sm:$0x1]
      %v1161 = vsel %vm1123, %v1096, %v1160
      %1162 = vst [vmem:[%s122 + $0x34] sm:$0x1] %v1161
      %v1163 = vld [vmem:[%s122 + $0x38] sm:$0xf]
      %v1164 = vsel %vm1118, %v1098, %v1163
      %1165 = vst [vmem:[%s122 + $0x38] sm:$0xf] %v1164
      %v1166 = vld [vmem:[%s122 + $0x3c] sm:$0x1]
      %v1167 = vsel %vm1123, %v1100, %v1166
      %1168 = vst [vmem:[%s122 + $0x3c] sm:$0x1] %v1167
      %v1169 = vld [vmem:[%s964 + $0x1] sm:$0xff]
      %v1170 = vld [vmem:[%s964 + $0x21] sm:$0xff]
      %v1171 = vld [vmem:[%s964 + $0x41] sm:$0xff]
      %v1172 = vld [vmem:[%s964 + $0x61] sm:$0xff]
      %v1173 = vld [vmem:[%s964 + $0x81] sm:$0xff]
      %v1174 = vld [vmem:[%s964 + $0xa1] sm:$0xff]
      %v1175 = vld [vmem:[%s964 + $0xc1] sm:$0xff]
      %v1176 = vld [vmem:[%s964 + $0xe1] sm:$0xff]
      %v1177 = vpack.c.bf16 %v1169, %v1169
      %v1178 = vpack.c.bf16 %v1170, %v1170
      %v1179 = vpack.c.bf16 %v1171, %v1171
      %v1180 = vpack.c.bf16 %v1172, %v1172
      %v1181 = vpack.c.bf16 %v1173, %v1173
      %v1182 = vpack.c.bf16 %v1174, %v1174
      %v1183 = vpack.c.bf16 %v1175, %v1175
      %v1184 = vpack.c.bf16 %v1176, %v1176
      %v1193 = vunpack.c.l.b16 %v1177
      %v1194 = vunpack.c.l.b16 %v1178
      %v1195 = vunpack.c.l.b16 %v1179
      %v1196 = vunpack.c.l.b16 %v1180
      %v1197 = vunpack.c.l.b16 %v1181
      %v1198 = vunpack.c.l.b16 %v1182
      %v1199 = vunpack.c.l.b16 %v1183
      %v1200 = vunpack.c.l.b16 %v1184
      %v1201 = vpack.c.b16 %v1193, %v1193
      %v1202 = vpack.c.b16 %v1194, %v1194
      %v1203 = vpack.c.b16 %v1195, %v1195
      %v1204 = vpack.c.b16 %v1196, %v1196
      %v1205 = vpack.c.b16 %v1197, %v1197
      %v1206 = vpack.c.b16 %v1198, %v1198
      %v1207 = vpack.c.b16 %v1199, %v1199
      %v1208 = vpack.c.b16 %v1200, %v1200
      %v1210 = vshrl.u32 %v1201, 16
      %v1212 = vrot.slane %v1210, 7
      %v1213 = vshll.u32 %v1201, 16
      %v1215 = vor.u32 %v1212, %v1213
      %v1216 = vrot.slane %v1212, 4
      %v1218 = vshrl.u32 %v1202, 16
      %v1220 = vrot.slane %v1218, 7
      %v1221 = vshll.u32 %v1202, 16
      %v1223 = vor.u32 %v1220, %v1221
      %v1224 = vrot.slane %v1220, 4
      %v1226 = vshrl.u32 %v1203, 16
      %v1228 = vrot.slane %v1226, 7
      %v1229 = vshll.u32 %v1203, 16
      %v1231 = vor.u32 %v1228, %v1229
      %v1232 = vrot.slane %v1228, 4
      %v1234 = vshrl.u32 %v1204, 16
      %v1236 = vrot.slane %v1234, 7
      %v1237 = vshll.u32 %v1204, 16
      %v1239 = vor.u32 %v1236, %v1237
      %v1240 = vrot.slane %v1236, 4
      %v1242 = vshrl.u32 %v1205, 16
      %v1244 = vrot.slane %v1242, 7
      %v1245 = vshll.u32 %v1205, 16
      %v1247 = vor.u32 %v1244, %v1245
      %v1248 = vrot.slane %v1244, 4
      %v1250 = vshrl.u32 %v1206, 16
      %v1252 = vrot.slane %v1250, 7
      %v1253 = vshll.u32 %v1206, 16
      %v1255 = vor.u32 %v1252, %v1253
      %v1256 = vrot.slane %v1252, 4
      %v1258 = vshrl.u32 %v1207, 16
      %v1260 = vrot.slane %v1258, 7
      %v1261 = vshll.u32 %v1207, 16
      %v1263 = vor.u32 %v1260, %v1261
      %v1264 = vrot.slane %v1260, 4
      %v1266 = vshrl.u32 %v1208, 16
      %v1268 = vrot.slane %v1266, 7
      %v1269 = vshll.u32 %v1208, 16
      %v1271 = vor.u32 %v1268, %v1269
      %v1272 = vrot.slane %v1268, 4
      %1273 = vrot.lane.b32.xlu0 %v1215, 32
      %v1274 = vpop.permute.xlu0 %1273
      %1275 = vrot.lane.b32.xlu0 %v1216, 32
      %v1276 = vpop.permute.xlu0 %1275
      %1277 = vrot.lane.b32.xlu0 %v1223, 32
      %v1278 = vpop.permute.xlu0 %1277
      %1279 = vrot.lane.b32.xlu0 %v1224, 32
      %v1280 = vpop.permute.xlu0 %1279
      %1281 = vrot.lane.b32.xlu0 %v1231, 32
      %v1282 = vpop.permute.xlu0 %1281
      %1283 = vrot.lane.b32.xlu0 %v1232, 32
      %v1284 = vpop.permute.xlu0 %1283
      %1285 = vrot.lane.b32.xlu0 %v1239, 32
      %v1286 = vpop.permute.xlu0 %1285
      %1287 = vrot.lane.b32.xlu0 %v1240, 32
      %v1288 = vpop.permute.xlu0 %1287
      %1289 = vrot.lane.b32.xlu0 %v1247, 32
      %v1290 = vpop.permute.xlu0 %1289
      %1291 = vrot.lane.b32.xlu0 %v1248, 32
      %v1292 = vpop.permute.xlu0 %1291
      %1293 = vrot.lane.b32.xlu0 %v1255, 32
      %v1294 = vpop.permute.xlu0 %1293
      %1295 = vrot.lane.b32.xlu0 %v1256, 32
      %v1296 = vpop.permute.xlu0 %1295
      %1297 = vrot.lane.b32.xlu0 %v1263, 32
      %v1298 = vpop.permute.xlu0 %1297
      %1299 = vrot.lane.b32.xlu0 %v1264, 32
      %v1300 = vpop.permute.xlu0 %1299
      %1301 = vrot.lane.b32.xlu0 %v1271, 32
      %v1302 = vpop.permute.xlu0 %1301
      %1303 = vrot.lane.b32.xlu0 %v1272, 32
      %v1304 = vpop.permute.xlu0 %1303
      %vm1321 = vcmask 290048
      %vm1322 = vmand %vm1321, %vm153
      %v1323 = vld [vmem:[%s122] sm:$0xf]
      %v1324 = vsel %vm1322, %v1274, %v1323
      %1325 = vst [vmem:[%s122] sm:$0xf] %v1324
      %vm1326 = vcmask 286976
      %vm1327 = vmand %vm1326, %vm124
      %v1328 = vld [vmem:[%s122 + $0x4] sm:$0x1]
      %v1329 = vsel %vm1327, %v1276, %v1328
      %1330 = vst [vmem:[%s122 + $0x4] sm:$0x1] %v1329
      %v1331 = vld [vmem:[%s122 + $0x8] sm:$0xf]
      %v1332 = vsel %vm1322, %v1278, %v1331
      %1333 = vst [vmem:[%s122 + $0x8] sm:$0xf] %v1332
      %v1334 = vld [vmem:[%s122 + $0xc] sm:$0x1]
      %v1335 = vsel %vm1327, %v1280, %v1334
      %1336 = vst [vmem:[%s122 + $0xc] sm:$0x1] %v1335
      %v1337 = vld [vmem:[%s122 + $0x10] sm:$0xf]
      %v1338 = vsel %vm1322, %v1282, %v1337
      %1339 = vst [vmem:[%s122 + $0x10] sm:$0xf] %v1338
      %v1340 = vld [vmem:[%s122 + $0x14] sm:$0x1]
      %v1341 = vsel %vm1327, %v1284, %v1340
      %1342 = vst [vmem:[%s122 + $0x14] sm:$0x1] %v1341
      %v1343 = vld [vmem:[%s122 + $0x18] sm:$0xf]
      %v1344 = vsel %vm1322, %v1286, %v1343
      %1345 = vst [vmem:[%s122 + $0x18] sm:$0xf] %v1344
      %v1346 = vld [vmem:[%s122 + $0x1c] sm:$0x1]
      %v1347 = vsel %vm1327, %v1288, %v1346
      %1348 = vst [vmem:[%s122 + $0x1c] sm:$0x1] %v1347
      %v1349 = vld [vmem:[%s122 + $0x20] sm:$0xf]
      %v1350 = vsel %vm1322, %v1290, %v1349
      %1351 = vst [vmem:[%s122 + $0x20] sm:$0xf] %v1350
      %v1352 = vld [vmem:[%s122 + $0x24] sm:$0x1]
      %v1353 = vsel %vm1327, %v1292, %v1352
      %1354 = vst [vmem:[%s122 + $0x24] sm:$0x1] %v1353
      %v1355 = vld [vmem:[%s122 + $0x28] sm:$0xf]
      %v1356 = vsel %vm1322, %v1294, %v1355
      %1357 = vst [vmem:[%s122 + $0x28] sm:$0xf] %v1356
      %v1358 = vld [vmem:[%s122 + $0x2c] sm:$0x1]
      %v1359 = vsel %vm1327, %v1296, %v1358
      %1360 = vst [vmem:[%s122 + $0x2c] sm:$0x1] %v1359
      %v1361 = vld [vmem:[%s122 + $0x30] sm:$0xf]
      %v1362 = vsel %vm1322, %v1298, %v1361
      %1363 = vst [vmem:[%s122 + $0x30] sm:$0xf] %v1362
      %v1364 = vld [vmem:[%s122 + $0x34] sm:$0x1]
      %v1365 = vsel %vm1327, %v1300, %v1364
      %1366 = vst [vmem:[%s122 + $0x34] sm:$0x1] %v1365
      %v1367 = vld [vmem:[%s122 + $0x38] sm:$0xf]
      %v1368 = vsel %vm1322, %v1302, %v1367
      %1369 = vst [vmem:[%s122 + $0x38] sm:$0xf] %v1368
      %v1370 = vld [vmem:[%s122 + $0x3c] sm:$0x1]
      %v1371 = vsel %vm1327, %v1304, %v1370
      %1372 = vst [vmem:[%s122 + $0x3c] sm:$0x1] %v1371
      %p1373 = scmp.lt.s32.totalorder %s12, 1
      %s1374 = scalar_select %p1373, %s12, 1
      %s1375 = smul.addr %s1374, 20
      %s1376 = smul.addr %s1375, 4
      %s1377 = scalar_lea.vmem %s1, %s1376
      // Predicated region
      $region25: #{tpu_custom_call.1} parent=23 // pred_check
        %p1378 = pneg %p56
      $region26: #{tpu_custom_call.1} parent=23 // pred_check_branch
        %1380 = sbr.rel (%p1378) target = $region28
      $region27: #{tpu_custom_call.1} parent=23 // pred_region
        _
      $region28: #{tpu_custom_call.1} parent=23 // pred_fallthru
        _
    $region24: #{tpu_custom_call.1} parent=5 // pred_fallthru
      _
    %p1381 = scmp.le.s32.totalorder 2, %s7
    // Predicated region
    $region29: #{tpu_custom_call.1} parent=5 // pred_check
      %p1382 = pneg %p1381
    $region30: #{tpu_custom_call.1} parent=5 // pred_check_branch
      %1384 = sbr.rel (%p1382) target = $region32
    $region31: #{tpu_custom_call.1} parent=5 // pred_region
      %s1385 = ssub.s32 %s7, 2
      // Predicated region
      $region33: #{tpu_custom_call.1} parent=31 // pred_check
        %p1386 = pneg %p62
      $region34: #{tpu_custom_call.1} parent=31 // pred_check_branch
        %1388 = sbr.rel (%p1386) target = $region36
      $region35: #{tpu_custom_call.1} parent=31 // pred_region
        %p1389 = scmp.lt.s32.totalorder %s13, 1
        %s1390 = scalar_select %p1389, %s13, 1
        %s1391 = smul.addr %s1390, 20
        %s1392 = smul.addr %s1391, 4
        %s1393 = scalar_lea.vmem %s1, %s1392
      $region36: #{tpu_custom_call.1} parent=31 // pred_fallthru
        _
    $region32: #{tpu_custom_call.1} parent=5 // pred_fallthru
      _
  $region6: #{tpu_custom_call.1} parent=0 // loop_footer
    %s11 = sadd.s32 1, %s7
  $region7: #{tpu_custom_call.1} parent=0 // loop_footer_branch
    %6 = sbr.rel target = $region3
  $region8: #{tpu_custom_call.1} parent=0 // loop_exit
    _

</llo_original>
